<compile_context>
chip_gen: v7x
topology: tpu7x:2x2x1
jax: 0.10.0
libtpu: 0.0.40
codegen_flags: <defaults>
</compile_context>

<pallas_src>
import functools

import jax
import jax.numpy as jnp
from jax.experimental import pallas as pl
from jax.experimental.pallas import tpu as pltpu


def deepset_kernel(x_ref, w1_ref, b1_ref, w2_ref, b2_ref,
                   w3x_ref, w3p_ref, b3_ref, w4_ref, b4_ref, o_ref,
                   *, bt, n):
    """One grid step = `bt` batch elements, each a set of `n` items."""
    x = x_ref[...]                                               # (bt*n, D_in)

    # phi: Linear -> ReLU -> Linear -> ReLU   (M = bt*n rows on the MXU)
    h1 = jnp.dot(x, w1_ref[...], preferred_element_type=jnp.float32) + b1_ref[...]
    h1 = jnp.maximum(h1, 0.0)                                    # (bt*n, H)
    phi = jnp.dot(h1, w2_ref[...], preferred_element_type=jnp.float32) + b2_ref[...]
    phi = jnp.maximum(phi, 0.0)                                  # (bt*n, L)

    latent = phi.shape[-1]
    hidden = h1.shape[-1]

    # Per-batch mean over the set axis only (minor dim L untouched -> cheap
    # leading-dim split reshape; sublane reduction per batch slice).
    pooled = jnp.mean(phi.reshape(bt, n, latent), axis=1)        # (bt, L)

    # Pooled branch at full batch-tile width, then broadcast back over N.
    pool_h = jnp.dot(pooled, w3p_ref[...],
                     preferred_element_type=jnp.float32)         # (bt, H)
    pool_h = jnp.broadcast_to(pool_h[:, None, :], (bt, n, hidden))
    pool_h = pool_h.reshape(bt * n, hidden)                      # (bt*n, H)

    # rho: Linear(cat([x, pooled])) -> ReLU -> Linear   (concat-free)
    h2 = (jnp.dot(x, w3x_ref[...], preferred_element_type=jnp.float32)
          + pool_h + b3_ref[...])                                # (bt*n, H)
    h2 = jnp.maximum(h2, 0.0)
    out = jnp.dot(h2, w4_ref[...], preferred_element_type=jnp.float32) + b4_ref[...]

    o_ref[...] = out.astype(o_ref.dtype)                         # (bt*n, L)


def _choose_block_batch(B, N, target_rows=512):
    """Largest batch tile that divides B, keeps Bt*N sublane-aligned, prefers
    >= 2 grid steps (v7x dual-TC), and caps the tile at ~target_rows rows."""
    divs = [d for d in range(1, B + 1) if B % d == 0]
    ok = [d for d in divs if (d * N) % 8 == 0 or d == B]
    cands = [d for d in ok if B // d >= 2] or ok
    under = [d for d in cands if d * N <= target_rows]
    return max(under) if under else min(cands)


def deepset_encoder(x, params, *, block_batch=None):
    B, N, D_in = x.shape
    w1, b1, w2, b2, w3x, w3p, b3, w4, b4 = params
    H = w1.shape[1]
    L = w2.shape[1]

    Bt = _choose_block_batch(B, N) if block_batch is None else block_batch
    assert B % Bt == 0, "batch tile must divide the batch"
    M = Bt * N
    assert (M % 8 == 0) or (Bt == B), "block rows must be sublane-aligned"

    # Lane layout: features on lanes, batch*set on sublanes.
    x2d = x.reshape(B * N, D_in)

    full = lambda a: pl.BlockSpec(a.shape, lambda i: (0,) * a.ndim)

    flops = int(2 * B * N * (2 * D_in * H + 2 * H * L) + 2 * B * L * H)
    bytes_accessed = int(4 * (B * N * D_in + B * N * L
                              + sum(int(p.size) for p in params)))

    kernel = functools.partial(deepset_kernel, bt=Bt, n=N)

    out2d = pl.pallas_call(
        kernel,
        out_shape=jax.ShapeDtypeStruct((B * N, L), jnp.float32),
        grid=(B // Bt,),
        in_specs=[
            pl.BlockSpec((M, D_in), lambda i: (i, 0)),           # x (batch tile)
            full(w1), full(b1),                                  # phi Linear 1
            full(w2), full(b2),                                  # phi Linear 2
            full(w3x), full(w3p), full(b3),                      # rho Linear 1 (split)
            full(w4), full(b4),                                  # rho Linear 2
        ],
        out_specs=pl.BlockSpec((M, L), lambda i: (i, 0)),
        compiler_params=pltpu.CompilerParams(
            dimension_semantics=("parallel",)),
        cost_estimate=pl.CostEstimate(flops=flops, transcendentals=0,
                                      bytes_accessed=bytes_accessed),
    )(x2d, w1, b1, w2, b2, w3x, w3p, b3, w4, b4)

    return out2d.reshape(B, N, L)


def reference(x, params):
    w1, b1, w2, b2, w3x, w3p, b3, w4, b4 = params
    h1 = jnp.maximum(x @ w1 + b1, 0.0)
    phi = jnp.maximum(h1 @ w2 + b2, 0.0)
    pooled = jnp.mean(phi, axis=1, keepdims=True)
    pooled_expanded = jnp.broadcast_to(
        pooled, (x.shape[0], x.shape[1], pooled.shape[2]))
    combined = jnp.concatenate([x, pooled_expanded], axis=2)
    w3 = jnp.concatenate([w3x, w3p], axis=0)
    h2 = jnp.maximum(combined @ w3 + b3, 0.0)
    return h2 @ w4 + b4


if __name__ == "__main__":
    # Module hyperparameters (DeepSetEncoder.__init__ defaults).
    input_dim, hidden_dim, latent_dim = 2, 16, 8
    B, N = 32, 8  # batch (module default batch_size), set size

    key = jax.random.PRNGKey(0)
    keys = jax.random.split(key, 10)

    # Parameters stored as (in, out); biases as (1, out).
    w1 = jax.random.normal(keys[0], (input_dim, hidden_dim), jnp.float32) * 0.2
    b1 = jax.random.normal(keys[1], (1, hidden_dim), jnp.float32) * 0.1
    w2 = jax.random.normal(keys[2], (hidden_dim, latent_dim), jnp.float32) * 0.2
    b2 = jax.random.normal(keys[3], (1, latent_dim), jnp.float32) * 0.1
    # rho's first Linear has in_features = input_dim + latent_dim; split rows:
    w3x = jax.random.normal(keys[4], (input_dim, hidden_dim), jnp.float32) * 0.2
    w3p = jax.random.normal(keys[5], (latent_dim, hidden_dim), jnp.float32) * 0.2
    b3 = jax.random.normal(keys[6], (1, hidden_dim), jnp.float32) * 0.1
    w4 = jax.random.normal(keys[7], (hidden_dim, latent_dim), jnp.float32) * 0.2
    b4 = jax.random.normal(keys[8], (1, latent_dim), jnp.float32) * 0.1
    params = (w1, b1, w2, b2, w3x, w3p, b3, w4, b4)

    x = jax.random.normal(keys[9], (B, N, input_dim), jnp.float32)

    out = deepset_encoder(x, params)
    out = jax.block_until_ready(out)

    ref = reference(x, params)
    assert out.shape == (B, N, latent_dim)
    assert jnp.allclose(out, ref, atol=1e-5, rtol=1e-5), "mismatch vs pure-JAX reference"

    print("KERNEL_OK")
</pallas_src>

<mosaic_0001>
module attributes {stable_mosaic.version = 11 : i64} {
  func.func @deepset_kernel(%arg0: i32, %arg1: memref<128x2xf32, #tpu.memory_space<vmem>>, %arg2: memref<2x16xf32, #tpu.memory_space<vmem>>, %arg3: memref<1x16xf32, #tpu.memory_space<vmem>>, %arg4: memref<16x8xf32, #tpu.memory_space<vmem>>, %arg5: memref<1x8xf32, #tpu.memory_space<vmem>>, %arg6: memref<2x16xf32, #tpu.memory_space<vmem>>, %arg7: memref<8x16xf32, #tpu.memory_space<vmem>>, %arg8: memref<1x16xf32, #tpu.memory_space<vmem>>, %arg9: memref<16x8xf32, #tpu.memory_space<vmem>>, %arg10: memref<1x8xf32, #tpu.memory_space<vmem>>, %arg11: memref<128x8xf32, #tpu.memory_space<vmem>>) attributes {dimension_semantics = [#tpu.dimension_semantics<parallel>], iteration_bounds = array<i64: 2>, scalar_prefetch = 0 : i64, scratch_operands = 0 : i64, tpu.core_type = #tpu.core_type<tc>, window_params = [{transform_indices = @transform_0, window_bounds = array<i64: 128, 2>}, {pipeline_mode = #tpu.pipeline_mode<synchronous>, transform_indices = @transform_1, window_bounds = array<i64: 2, 16>}, {pipeline_mode = #tpu.pipeline_mode<synchronous>, transform_indices = @transform_2, window_bounds = array<i64: 1, 16>}, {pipeline_mode = #tpu.pipeline_mode<synchronous>, transform_indices = @transform_3, window_bounds = array<i64: 16, 8>}, {pipeline_mode = #tpu.pipeline_mode<synchronous>, transform_indices = @transform_4, window_bounds = array<i64: 1, 8>}, {pipeline_mode = #tpu.pipeline_mode<synchronous>, transform_indices = @transform_5, window_bounds = array<i64: 2, 16>}, {pipeline_mode = #tpu.pipeline_mode<synchronous>, transform_indices = @transform_6, window_bounds = array<i64: 8, 16>}, {pipeline_mode = #tpu.pipeline_mode<synchronous>, transform_indices = @transform_7, window_bounds = array<i64: 1, 16>}, {pipeline_mode = #tpu.pipeline_mode<synchronous>, transform_indices = @transform_8, window_bounds = array<i64: 16, 8>}, {pipeline_mode = #tpu.pipeline_mode<synchronous>, transform_indices = @transform_9, window_bounds = array<i64: 1, 8>}, {transform_indices = @transform_10, window_bounds = array<i64: 128, 8>}]} {
    %c0 = arith.constant 0 : index
    %c0_0 = arith.constant 0 : index
    %0 = vector.load %arg1[%c0, %c0_0] : memref<128x2xf32, #tpu.memory_space<vmem>>, vector<128x2xf32>
    %c0_1 = arith.constant 0 : index
    %c0_2 = arith.constant 0 : index
    %1 = vector.load %arg2[%c0_1, %c0_2] : memref<2x16xf32, #tpu.memory_space<vmem>>, vector<2x16xf32>
    %cst = arith.constant dense<0.000000e+00> : vector<128x16xf32>
    %2 = tpu.matmul %0, %1, %cst {dimension_numbers = #tpu.dot_dimension_numbers<[1], [0], [0], [1], [0, 0, 1, 1], [], []>} : vector<128x2xf32>, vector<2x16xf32>, vector<128x16xf32> -> vector<128x16xf32>
    %c0_3 = arith.constant 0 : index
    %c0_4 = arith.constant 0 : index
    %3 = vector.load %arg3[%c0_3, %c0_4] : memref<1x16xf32, #tpu.memory_space<vmem>>, vector<1x16xf32>
    %4 = vector.broadcast %3 : vector<1x16xf32> to vector<128x16xf32>
    %5 = arith.addf %2, %4 : vector<128x16xf32>
    %cst_5 = arith.constant 0.000000e+00 : f32
    %6 = vector.broadcast %cst_5 : f32 to vector<128x16xf32>
    %7 = arith.maximumf %5, %6 : vector<128x16xf32>
    %c0_6 = arith.constant 0 : index
    %c0_7 = arith.constant 0 : index
    %8 = vector.load %arg4[%c0_6, %c0_7] : memref<16x8xf32, #tpu.memory_space<vmem>>, vector<16x8xf32>
    %cst_8 = arith.constant dense<0.000000e+00> : vector<128x8xf32>
    %9 = tpu.matmul %7, %8, %cst_8 {dimension_numbers = #tpu.dot_dimension_numbers<[1], [0], [0], [1], [0, 0, 1, 1], [], []>} : vector<128x16xf32>, vector<16x8xf32>, vector<128x8xf32> -> vector<128x8xf32>
    %c0_9 = arith.constant 0 : index
    %c0_10 = arith.constant 0 : index
    %10 = vector.load %arg5[%c0_9, %c0_10] : memref<1x8xf32, #tpu.memory_space<vmem>>, vector<1x8xf32>
    %11 = vector.broadcast %10 : vector<1x8xf32> to vector<128x8xf32>
    %12 = arith.addf %9, %11 : vector<128x8xf32>
    %cst_11 = arith.constant 0.000000e+00 : f32
    %13 = vector.broadcast %cst_11 : f32 to vector<128x8xf32>
    %14 = arith.maximumf %12, %13 : vector<128x8xf32>
    %15 = vector.shape_cast %14 : vector<128x8xf32> to vector<16x8x8xf32>
    %cst_12 = arith.constant dense<0.000000e+00> : vector<16x8xf32>
    %16 = vector.multi_reduction <add>, %15, %cst_12 [1] : vector<16x8x8xf32> to vector<16x8xf32>
    %cst_13 = arith.constant 8.000000e+00 : f32
    %17 = vector.broadcast %cst_13 : f32 to vector<16x8xf32>
    %18 = arith.divf %16, %17 : vector<16x8xf32>
    %c0_14 = arith.constant 0 : index
    %c0_15 = arith.constant 0 : index
    %19 = vector.load %arg7[%c0_14, %c0_15] : memref<8x16xf32, #tpu.memory_space<vmem>>, vector<8x16xf32>
    %cst_16 = arith.constant dense<0.000000e+00> : vector<16x16xf32>
    %20 = tpu.matmul %18, %19, %cst_16 {dimension_numbers = #tpu.dot_dimension_numbers<[1], [0], [0], [1], [0, 0, 1, 1], [], []>} : vector<16x8xf32>, vector<8x16xf32>, vector<16x16xf32> -> vector<16x16xf32>
    %21 = vector.shape_cast %20 : vector<16x16xf32> to vector<16x1x16xf32>
    %22 = vector.shape_cast %21 : vector<16x1x16xf32> to vector<16x1x16xf32>
    %23 = vector.broadcast %22 : vector<16x1x16xf32> to vector<16x8x16xf32>
    %24 = vector.shape_cast %23 : vector<16x8x16xf32> to vector<128x16xf32>
    %c0_17 = arith.constant 0 : index
    %c0_18 = arith.constant 0 : index
    %25 = vector.load %arg6[%c0_17, %c0_18] : memref<2x16xf32, #tpu.memory_space<vmem>>, vector<2x16xf32>
    %cst_19 = arith.constant dense<0.000000e+00> : vector<128x16xf32>
    %26 = tpu.matmul %0, %25, %cst_19 {dimension_numbers = #tpu.dot_dimension_numbers<[1], [0], [0], [1], [0, 0, 1, 1], [], []>} : vector<128x2xf32>, vector<2x16xf32>, vector<128x16xf32> -> vector<128x16xf32>
    %27 = arith.addf %26, %24 : vector<128x16xf32>
    %c0_20 = arith.constant 0 : index
    %c0_21 = arith.constant 0 : index
    %28 = vector.load %arg8[%c0_20, %c0_21] : memref<1x16xf32, #tpu.memory_space<vmem>>, vector<1x16xf32>
    %29 = vector.broadcast %28 : vector<1x16xf32> to vector<128x16xf32>
    %30 = arith.addf %27, %29 : vector<128x16xf32>
    %cst_22 = arith.constant 0.000000e+00 : f32
    %31 = vector.broadcast %cst_22 : f32 to vector<128x16xf32>
    %32 = arith.maximumf %30, %31 : vector<128x16xf32>
    %c0_23 = arith.constant 0 : index
    %c0_24 = arith.constant 0 : index
    %33 = vector.load %arg9[%c0_23, %c0_24] : memref<16x8xf32, #tpu.memory_space<vmem>>, vector<16x8xf32>
    %cst_25 = arith.constant dense<0.000000e+00> : vector<128x8xf32>
    %34 = tpu.matmul %32, %33, %cst_25 {dimension_numbers = #tpu.dot_dimension_numbers<[1], [0], [0], [1], [0, 0, 1, 1], [], []>} : vector<128x16xf32>, vector<16x8xf32>, vector<128x8xf32> -> vector<128x8xf32>
    %c0_26 = arith.constant 0 : index
    %c0_27 = arith.constant 0 : index
    %35 = vector.load %arg10[%c0_26, %c0_27] : memref<1x8xf32, #tpu.memory_space<vmem>>, vector<1x8xf32>
    %36 = vector.broadcast %35 : vector<1x8xf32> to vector<128x8xf32>
    %37 = arith.addf %34, %36 : vector<128x8xf32>
    %c0_28 = arith.constant 0 : index
    %c0_29 = arith.constant 0 : index
    %38 = vector.load %arg11[%c0_28, %c0_29] : memref<128x8xf32, #tpu.memory_space<vmem>>, vector<128x8xf32>
    tpu.vector_store %arg11[%c0_28, %c0_29], %37 {strides = array<i32>} : memref<128x8xf32, #tpu.memory_space<vmem>>, vector<128x8xf32>,
    return
  }
  func.func @transform_0(%arg0: i32) -> (i32, i32) {
    %c0_i32 = arith.constant 0 : i32
    %c0_i32_0 = arith.constant 0 : i32
    return %arg0, %c0_i32 : i32, i32
  }
  func.func @transform_1(%arg0: i32) -> (i32, i32) {
    %c0_i32 = arith.constant 0 : i32
    %c0_i32_0 = arith.constant 0 : i32
    %c0_i32_1 = arith.constant 0 : i32
    return %c0_i32, %c0_i32_0 : i32, i32
  }
  func.func @transform_2(%arg0: i32) -> (i32, i32) {
    %c0_i32 = arith.constant 0 : i32
    %c0_i32_0 = arith.constant 0 : i32
    %c0_i32_1 = arith.constant 0 : i32
    return %c0_i32, %c0_i32_0 : i32, i32
  }
  func.func @transform_3(%arg0: i32) -> (i32, i32) {
    %c0_i32 = arith.constant 0 : i32
    %c0_i32_0 = arith.constant 0 : i32
    %c0_i32_1 = arith.constant 0 : i32
    return %c0_i32, %c0_i32_0 : i32, i32
  }
  func.func @transform_4(%arg0: i32) -> (i32, i32) {
    %c0_i32 = arith.constant 0 : i32
    %c0_i32_0 = arith.constant 0 : i32
    %c0_i32_1 = arith.constant 0 : i32
    return %c0_i32, %c0_i32_0 : i32, i32
  }
  func.func @transform_5(%arg0: i32) -> (i32, i32) {
    %c0_i32 = arith.constant 0 : i32
    %c0_i32_0 = arith.constant 0 : i32
    %c0_i32_1 = arith.constant 0 : i32
    return %c0_i32, %c0_i32_0 : i32, i32
  }
  func.func @transform_6(%arg0: i32) -> (i32, i32) {
    %c0_i32 = arith.constant 0 : i32
    %c0_i32_0 = arith.constant 0 : i32
    %c0_i32_1 = arith.constant 0 : i32
    return %c0_i32, %c0_i32_0 : i32, i32
  }
  func.func @transform_7(%arg0: i32) -> (i32, i32) {
    %c0_i32 = arith.constant 0 : i32
    %c0_i32_0 = arith.constant 0 : i32
    %c0_i32_1 = arith.constant 0 : i32
    return %c0_i32, %c0_i32_0 : i32, i32
  }
  func.func @transform_8(%arg0: i32) -> (i32, i32) {
    %c0_i32 = arith.constant 0 : i32
    %c0_i32_0 = arith.constant 0 : i32
    %c0_i32_1 = arith.constant 0 : i32
    return %c0_i32, %c0_i32_0 : i32, i32
  }
  func.func @transform_9(%arg0: i32) -> (i32, i32) {
    %c0_i32 = arith.constant 0 : i32
    %c0_i32_0 = arith.constant 0 : i32
    %c0_i32_1 = arith.constant 0 : i32
    return %c0_i32, %c0_i32_0 : i32, i32
  }
  func.func @transform_10(%arg0: i32) -> (i32, i32) {
    %c0_i32 = arith.constant 0 : i32
    %c0_i32_0 = arith.constant 0 : i32
    return %arg0, %c0_i32 : i32, i32
  }
}

</mosaic_0001>

<llo_original>
// kernel: tpu_custom_call.1
$region0: #{tpu_custom_call.1}
  #allocation0 [shape = 'u32[]', space=smem, size = 0x4, offset = 0x4, fixed_abs, tag = 'smem constant byte address 0x4 - core index']
  #allocation1 [shape = 'u32[144,128]{1,0:T(1,128)}', space=vmem, size = 0x12000, scoped, tag = 'internal scratch']
  %s0 = inlined_call_operand.vmem [shape: f32[256,2], index: 0, kind: input, shape index: {}]
  %s1 = inlined_call_operand.vmem [shape: f32[2,16], index: 1, kind: input, shape index: {}]
  %s2 = inlined_call_operand.vmem [shape: f32[1,16], index: 2, kind: input, shape index: {}]
  %s3 = inlined_call_operand.vmem [shape: f32[16,8], index: 3, kind: input, shape index: {}]
  %s4 = inlined_call_operand.vmem [shape: f32[1,8], index: 4, kind: input, shape index: {}]
  %s5 = inlined_call_operand.vmem [shape: f32[2,16], index: 5, kind: input, shape index: {}]
  %s6 = inlined_call_operand.vmem [shape: f32[8,16], index: 6, kind: input, shape index: {}]
  %s7 = inlined_call_operand.vmem [shape: f32[1,16], index: 7, kind: input, shape index: {}]
  %s8 = inlined_call_operand.vmem [shape: f32[16,8], index: 8, kind: input, shape index: {}]
  %s9 = inlined_call_operand.vmem [shape: f32[1,8], index: 9, kind: input, shape index: {}]
  %s10 = inlined_call_operand.vmem [shape: f32[256,8], index: 10, kind: output, shape index: {}]
  %s11 = sld [smem:[#allocation0]]
  $region73: #{tpu_custom_call.1} parent=0
    _
  %s13 = ssub.s32 1, %s11
  %s14 = scalar_select 0, %s13, %s11
  loop: start=0, step=1, limit=4
  $region2: #{tpu_custom_call.1} parent=0 // loop_pre_header
    _
  $region3: #{tpu_custom_call.1} parent=0 // loop_header
    %s16 = sphi 0, %s20
    %p17 = scmp.ge.s32.totalorder %s16, 4
    %s26 = sphi 0, %s28
    %s29 = sphi 0, %s26
    %s30 = sphi 0, %s29
    %s46 = sphi 0, %s30
    %s50 = sphi 0, %s50
    %s52 = sphi 0, %s50
    %s53 = sphi 0, %s52
    %s67 = sphi 0, %s53
    %s71 = sphi 0, %s71
    %s73 = sphi 0, %s71
    %s74 = sphi 0, %s73
    %s88 = sphi 0, %s74
    %s92 = sphi 0, %s92
    %s94 = sphi 0, %s92
    %s95 = sphi 0, %s94
    %s109 = sphi 0, %s95
    %s113 = sphi 0, %s113
    %s115 = sphi 0, %s113
    %s116 = sphi 0, %s115
    %s130 = sphi 0, %s116
    %s134 = sphi 0, %s134
    %s136 = sphi 0, %s134
    %s137 = sphi 0, %s136
    %s151 = sphi 0, %s137
    %s155 = sphi 0, %s155
    %s157 = sphi 0, %s155
    %s158 = sphi 0, %s157
    %s172 = sphi 0, %s158
    %s176 = sphi 0, %s176
    %s178 = sphi 0, %s176
    %s179 = sphi 0, %s178
    %s193 = sphi 0, %s179
    %s197 = sphi 0, %s197
    %s199 = sphi 0, %s197
    %s200 = sphi 0, %s199
    %s214 = sphi 0, %s200
    %s218 = sphi 0, %s218
    %s220 = sphi 0, %s218
    %s221 = sphi 0, %s220
    %s235 = sphi 0, %s221
    %s241 = sphi 0, %s243
    %s244 = sphi 0, %s241
    %s245 = sphi 0, %s244
    %s261 = sphi 0, %s245
  $region4: #{tpu_custom_call.1} parent=0 // loop_header_branch
    %19 = sbr.rel (%p17) target = $region8
  $region5: #{tpu_custom_call.1} parent=0 // loop_body
    %s21 = ssub.s32 %s16, 1
    %s22 = ssub.s32 %s16, 2
    %s23 = sadd.s32 %s16, 1
    %s24 = ssub.s32 %s16, %s23
    %p25 = scmp.eq.s32.totalorder %s24, 0
    %s27 = sadd.s32 %s26, 1
    %s28 = scalar_select %p25, %s26, %s27
    %p31 = pneg %p25
    %p32 = scmp.eq.s32.totalorder %s16, 1
    %p33 = por %p31, %p32
    %p34 = scmp.ne.s32.totalorder %s26, %s29
    %p35 = scmp.eq.s32.totalorder %s16, 0
    %p36 = por %p34, %p35
    %p37 = scmp.ne.s32.totalorder %s26, %s29
    %p38 = scmp.eq.s32.totalorder %s21, 1
    %p39 = por %p37, %p38
    %p40 = scmp.ne.s32.totalorder %s29, %s30
    %p41 = scmp.eq.s32.totalorder %s21, 0
    %p42 = por %p40, %p41
    %p43 = scmp.ne.s32.totalorder %s29, %s30
    %p44 = scmp.eq.s32.totalorder %s22, 1
    %p45 = por %p43, %p44
    %p47 = scmp.ne.s32.totalorder %s30, %s46
    %p48 = scmp.eq.s32.totalorder %s22, 0
    %p49 = por %p47, %p48
    %s51 = sadd.s32 %s50, 1
    %p54 = scmp.eq.s32.totalorder %s16, 1
    %p55 = scmp.ne.s32.totalorder %s50, %s52
    %p56 = scmp.eq.s32.totalorder %s16, 0
    %p57 = por %p55, %p56
    %p58 = scmp.ne.s32.totalorder %s50, %s52
    %p59 = scmp.eq.s32.totalorder %s21, 1
    %p60 = por %p58, %p59
    %p61 = scmp.ne.s32.totalorder %s52, %s53
    %p62 = scmp.eq.s32.totalorder %s21, 0
    %p63 = por %p61, %p62
    %p64 = scmp.ne.s32.totalorder %s52, %s53
    %p65 = scmp.eq.s32.totalorder %s22, 1
    %p66 = por %p64, %p65
    %p68 = scmp.ne.s32.totalorder %s53, %s67
    %p69 = scmp.eq.s32.totalorder %s22, 0
    %p70 = por %p68, %p69
    %s72 = sadd.s32 %s71, 1
    %p75 = scmp.eq.s32.totalorder %s16, 1
    %p76 = scmp.ne.s32.totalorder %s71, %s73
    %p77 = scmp.eq.s32.totalorder %s16, 0
    %p78 = por %p76, %p77
    %p79 = scmp.ne.s32.totalorder %s71, %s73
    %p80 = scmp.eq.s32.totalorder %s21, 1
    %p81 = por %p79, %p80
    %p82 = scmp.ne.s32.totalorder %s73, %s74
    %p83 = scmp.eq.s32.totalorder %s21, 0
    %p84 = por %p82, %p83
    %p85 = scmp.ne.s32.totalorder %s73, %s74
    %p86 = scmp.eq.s32.totalorder %s22, 1
    %p87 = por %p85, %p86
    %p89 = scmp.ne.s32.totalorder %s74, %s88
    %p90 = scmp.eq.s32.totalorder %s22, 0
    %p91 = por %p89, %p90
    %s93 = sadd.s32 %s92, 1
    %p96 = scmp.eq.s32.totalorder %s16, 1
    %p97 = scmp.ne.s32.totalorder %s92, %s94
    %p98 = scmp.eq.s32.totalorder %s16, 0
    %p99 = por %p97, %p98
    %p100 = scmp.ne.s32.totalorder %s92, %s94
    %p101 = scmp.eq.s32.totalorder %s21, 1
    %p102 = por %p100, %p101
    %p103 = scmp.ne.s32.totalorder %s94, %s95
    %p104 = scmp.eq.s32.totalorder %s21, 0
    %p105 = por %p103, %p104
    %p106 = scmp.ne.s32.totalorder %s94, %s95
    %p107 = scmp.eq.s32.totalorder %s22, 1
    %p108 = por %p106, %p107
    %p110 = scmp.ne.s32.totalorder %s95, %s109
    %p111 = scmp.eq.s32.totalorder %s22, 0
    %p112 = por %p110, %p111
    %s114 = sadd.s32 %s113, 1
    %p117 = scmp.eq.s32.totalorder %s16, 1
    %p118 = scmp.ne.s32.totalorder %s113, %s115
    %p119 = scmp.eq.s32.totalorder %s16, 0
    %p120 = por %p118, %p119
    %p121 = scmp.ne.s32.totalorder %s113, %s115
    %p122 = scmp.eq.s32.totalorder %s21, 1
    %p123 = por %p121, %p122
    %p124 = scmp.ne.s32.totalorder %s115, %s116
    %p125 = scmp.eq.s32.totalorder %s21, 0
    %p126 = por %p124, %p125
    %p127 = scmp.ne.s32.totalorder %s115, %s116
    %p128 = scmp.eq.s32.totalorder %s22, 1
    %p129 = por %p127, %p128
    %p131 = scmp.ne.s32.totalorder %s116, %s130
    %p132 = scmp.eq.s32.totalorder %s22, 0
    %p133 = por %p131, %p132
    %s135 = sadd.s32 %s134, 1
    %p138 = scmp.eq.s32.totalorder %s16, 1
    %p139 = scmp.ne.s32.totalorder %s134, %s136
    %p140 = scmp.eq.s32.totalorder %s16, 0
    %p141 = por %p139, %p140
    %p142 = scmp.ne.s32.totalorder %s134, %s136
    %p143 = scmp.eq.s32.totalorder %s21, 1
    %p144 = por %p142, %p143
    %p145 = scmp.ne.s32.totalorder %s136, %s137
    %p146 = scmp.eq.s32.totalorder %s21, 0
    %p147 = por %p145, %p146
    %p148 = scmp.ne.s32.totalorder %s136, %s137
    %p149 = scmp.eq.s32.totalorder %s22, 1
    %p150 = por %p148, %p149
    %p152 = scmp.ne.s32.totalorder %s137, %s151
    %p153 = scmp.eq.s32.totalorder %s22, 0
    %p154 = por %p152, %p153
    %s156 = sadd.s32 %s155, 1
    %p159 = scmp.eq.s32.totalorder %s16, 1
    %p160 = scmp.ne.s32.totalorder %s155, %s157
    %p161 = scmp.eq.s32.totalorder %s16, 0
    %p162 = por %p160, %p161
    %p163 = scmp.ne.s32.totalorder %s155, %s157
    %p164 = scmp.eq.s32.totalorder %s21, 1
    %p165 = por %p163, %p164
    %p166 = scmp.ne.s32.totalorder %s157, %s158
    %p167 = scmp.eq.s32.totalorder %s21, 0
    %p168 = por %p166, %p167
    %p169 = scmp.ne.s32.totalorder %s157, %s158
    %p170 = scmp.eq.s32.totalorder %s22, 1
    %p171 = por %p169, %p170
    %p173 = scmp.ne.s32.totalorder %s158, %s172
    %p174 = scmp.eq.s32.totalorder %s22, 0
    %p175 = por %p173, %p174
    %s177 = sadd.s32 %s176, 1
    %p180 = scmp.eq.s32.totalorder %s16, 1
    %p181 = scmp.ne.s32.totalorder %s176, %s178
    %p182 = scmp.eq.s32.totalorder %s16, 0
    %p183 = por %p181, %p182
    %p184 = scmp.ne.s32.totalorder %s176, %s178
    %p185 = scmp.eq.s32.totalorder %s21, 1
    %p186 = por %p184, %p185
    %p187 = scmp.ne.s32.totalorder %s178, %s179
    %p188 = scmp.eq.s32.totalorder %s21, 0
    %p189 = por %p187, %p188
    %p190 = scmp.ne.s32.totalorder %s178, %s179
    %p191 = scmp.eq.s32.totalorder %s22, 1
    %p192 = por %p190, %p191
    %p194 = scmp.ne.s32.totalorder %s179, %s193
    %p195 = scmp.eq.s32.totalorder %s22, 0
    %p196 = por %p194, %p195
    %s198 = sadd.s32 %s197, 1
    %p201 = scmp.eq.s32.totalorder %s16, 1
    %p202 = scmp.ne.s32.totalorder %s197, %s199
    %p203 = scmp.eq.s32.totalorder %s16, 0
    %p204 = por %p202, %p203
    %p205 = scmp.ne.s32.totalorder %s197, %s199
    %p206 = scmp.eq.s32.totalorder %s21, 1
    %p207 = por %p205, %p206
    %p208 = scmp.ne.s32.totalorder %s199, %s200
    %p209 = scmp.eq.s32.totalorder %s21, 0
    %p210 = por %p208, %p209
    %p211 = scmp.ne.s32.totalorder %s199, %s200
    %p212 = scmp.eq.s32.totalorder %s22, 1
    %p213 = por %p211, %p212
    %p215 = scmp.ne.s32.totalorder %s200, %s214
    %p216 = scmp.eq.s32.totalorder %s22, 0
    %p217 = por %p215, %p216
    %s219 = sadd.s32 %s218, 1
    %p222 = scmp.eq.s32.totalorder %s16, 1
    %p223 = scmp.ne.s32.totalorder %s218, %s220
    %p224 = scmp.eq.s32.totalorder %s16, 0
    %p225 = por %p223, %p224
    %p226 = scmp.ne.s32.totalorder %s218, %s220
    %p227 = scmp.eq.s32.totalorder %s21, 1
    %p228 = por %p226, %p227
    %p229 = scmp.ne.s32.totalorder %s220, %s221
    %p230 = scmp.eq.s32.totalorder %s21, 0
    %p231 = por %p229, %p230
    %p232 = scmp.ne.s32.totalorder %s220, %s221
    %p233 = scmp.eq.s32.totalorder %s22, 1
    %p234 = por %p232, %p233
    %p236 = scmp.ne.s32.totalorder %s221, %s235
    %p237 = scmp.eq.s32.totalorder %s22, 0
    %p238 = por %p236, %p237
    %s239 = ssub.s32 %s16, %s23
    %p240 = scmp.eq.s32.totalorder %s239, 0
    %s242 = sadd.s32 %s241, 1
    %s243 = scalar_select %p240, %s241, %s242
    %p246 = pneg %p240
    %p247 = scmp.eq.s32.totalorder %s16, 1
    %p248 = por %p246, %p247
    %p249 = scmp.ne.s32.totalorder %s241, %s244
    %p250 = scmp.eq.s32.totalorder %s16, 0
    %p251 = por %p249, %p250
    %p252 = scmp.ne.s32.totalorder %s241, %s244
    %p253 = scmp.eq.s32.totalorder %s21, 1
    %p254 = por %p252, %p253
    %p255 = scmp.ne.s32.totalorder %s244, %s245
    %p256 = scmp.eq.s32.totalorder %s21, 0
    %p257 = por %p255, %p256
    %p258 = scmp.ne.s32.totalorder %s244, %s245
    %p259 = scmp.eq.s32.totalorder %s22, 1
    %p260 = por %p258, %p259
    %p262 = scmp.ne.s32.totalorder %s245, %s261
    %p263 = scmp.eq.s32.totalorder %s22, 0
    %p264 = por %p262, %p263
    %p265 = scmp.le.s32.totalorder 1, %s16
    %p266 = scmp.lt.s32.totalorder %s16, 3
    %p267 = pnand %p265, %p266
    %p268 = pneg %p267
    // Predicated region
    $region9: #{tpu_custom_call.1} parent=5 // pred_check
      _
    $region10: #{tpu_custom_call.1} parent=5 // pred_check_branch
      %270 = sbr.rel (%p267) target = $region12
    $region11: #{tpu_custom_call.1} parent=5 // pred_region
      %s271 = ssub.s32 %s16, 1
      // Predicated region
      $region13: #{tpu_custom_call.1} parent=11 // pred_check
        %p272 = pneg %p63
      $region14: #{tpu_custom_call.1} parent=11 // pred_check_branch
        %274 = sbr.rel (%p272) target = $region16
      $region15: #{tpu_custom_call.1} parent=11 // pred_region
        _
      $region16: #{tpu_custom_call.1} parent=11 // pred_fallthru
        _
      // Predicated region
      $region17: #{tpu_custom_call.1} parent=11 // pred_check
        %p275 = pneg %p84
      $region18: #{tpu_custom_call.1} parent=11 // pred_check_branch
        %277 = sbr.rel (%p275) target = $region20
      $region19: #{tpu_custom_call.1} parent=11 // pred_region
        _
      $region20: #{tpu_custom_call.1} parent=11 // pred_fallthru
        _
      // Predicated region
      $region21: #{tpu_custom_call.1} parent=11 // pred_check
        %p278 = pneg %p105
      $region22: #{tpu_custom_call.1} parent=11 // pred_check_branch
        %280 = sbr.rel (%p278) target = $region24
      $region23: #{tpu_custom_call.1} parent=11 // pred_region
        _
      $region24: #{tpu_custom_call.1} parent=11 // pred_fallthru
        _
      // Predicated region
      $region25: #{tpu_custom_call.1} parent=11 // pred_check
        %p281 = pneg %p126
      $region26: #{tpu_custom_call.1} parent=11 // pred_check_branch
        %283 = sbr.rel (%p281) target = $region28
      $region27: #{tpu_custom_call.1} parent=11 // pred_region
        _
      $region28: #{tpu_custom_call.1} parent=11 // pred_fallthru
        _
      // Predicated region
      $region29: #{tpu_custom_call.1} parent=11 // pred_check
        %p284 = pneg %p147
      $region30: #{tpu_custom_call.1} parent=11 // pred_check_branch
        %286 = sbr.rel (%p284) target = $region32
      $region31: #{tpu_custom_call.1} parent=11 // pred_region
        _
      $region32: #{tpu_custom_call.1} parent=11 // pred_fallthru
        _
      // Predicated region
      $region33: #{tpu_custom_call.1} parent=11 // pred_check
        %p287 = pneg %p168
      $region34: #{tpu_custom_call.1} parent=11 // pred_check_branch
        %289 = sbr.rel (%p287) target = $region36
      $region35: #{tpu_custom_call.1} parent=11 // pred_region
        _
      $region36: #{tpu_custom_call.1} parent=11 // pred_fallthru
        _
      // Predicated region
      $region37: #{tpu_custom_call.1} parent=11 // pred_check
        %p290 = pneg %p189
      $region38: #{tpu_custom_call.1} parent=11 // pred_check_branch
        %292 = sbr.rel (%p290) target = $region40
      $region39: #{tpu_custom_call.1} parent=11 // pred_region
        _
      $region40: #{tpu_custom_call.1} parent=11 // pred_fallthru
        _
      // Predicated region
      $region41: #{tpu_custom_call.1} parent=11 // pred_check
        %p293 = pneg %p210
      $region42: #{tpu_custom_call.1} parent=11 // pred_check_branch
        %295 = sbr.rel (%p293) target = $region44
      $region43: #{tpu_custom_call.1} parent=11 // pred_region
        _
      $region44: #{tpu_custom_call.1} parent=11 // pred_fallthru
        _
      // Predicated region
      $region45: #{tpu_custom_call.1} parent=11 // pred_check
        %p296 = pneg %p231
      $region46: #{tpu_custom_call.1} parent=11 // pred_check_branch
        %298 = sbr.rel (%p296) target = $region48
      $region47: #{tpu_custom_call.1} parent=11 // pred_region
        _
      $region48: #{tpu_custom_call.1} parent=11 // pred_fallthru
        _
    $region12: #{tpu_custom_call.1} parent=5 // pred_fallthru
      _
    %p299 = scmp.lt.s32.totalorder %s16, 2
    // Predicated region
    $region49: #{tpu_custom_call.1} parent=5 // pred_check
      %p300 = pneg %p299
    $region50: #{tpu_custom_call.1} parent=5 // pred_check_branch
      %302 = sbr.rel (%p300) target = $region52
    $region51: #{tpu_custom_call.1} parent=5 // pred_region
      // Predicated region
      $region53: #{tpu_custom_call.1} parent=51 // pred_check
        %p303 = pneg %p36
      $region54: #{tpu_custom_call.1} parent=51 // pred_check_branch
        %305 = sbr.rel (%p303) target = $region56
      $region55: #{tpu_custom_call.1} parent=51 // pred_region
        %s306 = smul.u32 16, %s16
        %p307 = scmp.lt.s32.totalorder %s306, 31
        %s308 = scalar_select %p307, %s306, 31
        %s309 = smul.addr %s308, 8
        %s310 = scalar_lea.vmem %s0, %s309
        %s311 = smul.u32 16, %s16
      $region56: #{tpu_custom_call.1} parent=51 // pred_fallthru
        _
    $region52: #{tpu_custom_call.1} parent=5 // pred_fallthru
      _
    %p312 = scmp.le.s32.totalorder 1, %s16
    %p313 = scmp.lt.s32.totalorder %s16, 3
    %p314 = pnand %p312, %p313
    %p315 = pneg %p314
    // Predicated region
    $region57: #{tpu_custom_call.1} parent=5 // pred_check
      _
    $region58: #{tpu_custom_call.1} parent=5 // pred_check_branch
      %317 = sbr.rel (%p314) target = $region60
    $region59: #{tpu_custom_call.1} parent=5 // pred_region
      %s318 = ssub.s32 %s16, 1
      %s319 = smul.u32 16, %s21
      %p320 = scmp.lt.s32.totalorder %s319, 31
      %s321 = scalar_select %p320, %s319, 31
      %s322 = smul.addr %s321, 8
      %s323 = scalar_lea.vmem %s0, %s322
      %p324 = pneg %p42
      %p325 = pneg %p39
      %p326 = pneg %p63
      %p327 = pneg %p60
      %p328 = pneg %p84
      %p329 = pneg %p81
      %p330 = pneg %p105
      %p331 = pneg %p102
      %p332 = pneg %p126
      %p333 = pneg %p123
      %p334 = pneg %p147
      %p335 = pneg %p144
      %p336 = pneg %p168
      %p337 = pneg %p165
      %p338 = pneg %p189
      %p339 = pneg %p186
      %p340 = pneg %p210
      %p341 = pneg %p207
      %p342 = pneg %p231
      %p343 = pneg %p228
      %p344 = pneg %p257
      %p345 = pneg %p254
      %s346 = smul.u32 16, %s21
      %p347 = scmp.lt.s32.totalorder %s346, 31
      %s348 = scalar_select %p347, %s346, 31
      %s349 = smul.addr %s348, 8
      %s350 = scalar_lea.vmem %s10, %s349
      %s351 = smul.u32 16, %s21
      %p352 = scmp.lt.s32.totalorder %s351, 31
      %s353 = scalar_select %p352, %s351, 31
      %s354 = smul.addr %s353, 8
      %s355 = scalar_lea.vmem %s0, %s354
      %s356 = smul.u32 16, %s21
      %s357 = smul.u32 16, %s21
      %p358 = scmp.lt.s32.totalorder %s357, 31
      %s359 = scalar_select %p358, %s357, 31
      %s360 = smul.addr %s359, 8
      %s361 = scalar_lea.vmem %s10, %s360
      %s362 = smul.u32 16, %s21
      %v363 = vld [vmem:[%s355] sm:$0xff]
      %v364 = vld [vmem:[%s355 + $0x8] sm:$0xff]
      %v365 = vld [vmem:[%s355 + $0x10] sm:$0xff]
      %v366 = vld [vmem:[%s355 + $0x18] sm:$0xff]
      %v367 = vld [vmem:[%s355 + $0x20] sm:$0xff]
      %v368 = vld [vmem:[%s355 + $0x28] sm:$0xff]
      %v369 = vld [vmem:[%s355 + $0x30] sm:$0xff]
      %v370 = vld [vmem:[%s355 + $0x38] sm:$0xff]
      %v371 = vld [vmem:[%s355 + $0x40] sm:$0xff]
      %v372 = vld [vmem:[%s355 + $0x48] sm:$0xff]
      %v373 = vld [vmem:[%s355 + $0x50] sm:$0xff]
      %v374 = vld [vmem:[%s355 + $0x58] sm:$0xff]
      %v375 = vld [vmem:[%s355 + $0x60] sm:$0xff]
      %v376 = vld [vmem:[%s355 + $0x68] sm:$0xff]
      %v377 = vld [vmem:[%s355 + $0x70] sm:$0xff]
      %v378 = vld [vmem:[%s355 + $0x78] sm:$0xff]
      %v379 = vld [vmem:[%s1] sm:$0x3]
      %v380 = vld [vmem:[%s2] sm:$0x1]
      %v382 = vlaneseq
      %v383 = vshrl.u32 %v382, 7
      %v384 = vsub.s32 0, %v383
      %v385 = vrot.slane %v380, %v384
      %vm387 = vcmask 15360
      %v389 = vsel %vm387, %v363, 0
      %v392 = vsel %vm387, %v364, 0
      %v395 = vsel %vm387, %v365, 0
      %v398 = vsel %vm387, %v366, 0
      %v401 = vsel %vm387, %v367, 0
      %v404 = vsel %vm387, %v368, 0
      %v407 = vsel %vm387, %v369, 0
      %v410 = vsel %vm387, %v370, 0
      %v413 = vsel %vm387, %v371, 0
      %v416 = vsel %vm387, %v372, 0
      %v419 = vsel %vm387, %v373, 0
      %v422 = vsel %vm387, %v374, 0
      %v425 = vsel %vm387, %v375, 0
      %v428 = vsel %vm387, %v376, 0
      %v431 = vsel %vm387, %v377, 0
      %v434 = vsel %vm387, %v378, 0
      %vm436 = vcmask 1041408
      %v438 = vsel %vm436, %v379, 0
      %440 = vmatprep.subr.mxu0 0.0
      %441 = vmatpush1.msra.mxu0 %v438
      %442 = vmatprep.subr.mxu0 0.0
      %443 = vmatpush1.msra.mxu0 0.0
      %444 = vmatprep.subr.mxu0 0.0
      %445 = vmatpush1.msra.mxu0 0.0
      %446 = vmatprep.subr.mxu0 0.0
      %447 = vmatpush1.msra.mxu0 0.0
      %448 = vmatprep.subr.mxu0 0.0
      %449 = vmatpush1.msra.mxu0 0.0
      %450 = vmatprep.subr.mxu0 0.0
      %451 = vmatpush1.msra.mxu0 0.0
      %452 = vmatprep.subr.mxu0 0.0
      %453 = vmatpush1.msra.mxu0 0.0
      %454 = vmatprep.subr.mxu0 0.0
      %455 = vmatpush1.msra.mxu0 0.0
      %456 = vmatprep.subr.mxu0 0.0
      %457 = vmatpush1.msra.mxu0 0.0
      %458 = vmatprep.subr.mxu0 0.0
      %459 = vmatpush1.msra.mxu0 0.0
      %460 = vmatprep.subr.mxu0 0.0
      %461 = vmatpush1.msra.mxu0 0.0
      %462 = vmatprep.subr.mxu0 0.0
      %463 = vmatpush1.msra.mxu0 0.0
      %464 = vmatprep.subr.mxu0 0.0
      %465 = vmatpush1.msra.mxu0 0.0
      %466 = vmatprep.subr.mxu0 0.0
      %467 = vmatpush1.msra.mxu0 0.0
      %468 = vmatprep.subr.mxu0 0.0
      %469 = vmatpush1.msra.mxu0 0.0
      %470 = vmatprep.subr.mxu0 0.0
      %471 = vmatpush1.msra.mxu0 0.0
      %472 = vmatprep.subr.mxu0 0.0
      %473 = vmatpush1.msra.mxu0 0.0
      %474 = vmatprep.subr.mxu0 0.0
      %475 = vmatpush1.msra.mxu0 0.0
      %476 = vmatprep.subr.mxu0 0.0
      %477 = vmatpush1.msra.mxu0 0.0
      %478 = vmatprep.subr.mxu0 0.0
      %479 = vmatpush1.msra.mxu0 0.0
      %480 = vmatprep.subr.mxu0 0.0
      %481 = vmatpush1.msra.mxu0 0.0
      %482 = vmatprep.subr.mxu0 0.0
      %483 = vmatpush1.msra.mxu0 0.0
      %484 = vmatprep.subr.mxu0 0.0
      %485 = vmatpush1.msra.mxu0 0.0
      %486 = vmatprep.subr.mxu0 0.0
      %487 = vmatpush1.msra.mxu0 0.0
      %488 = vmatprep.subr.mxu0 0.0
      %489 = vmatpush1.msra.mxu0 0.0
      %490 = vmatprep.subr.mxu0 0.0
      %491 = vmatpush1.msra.mxu0 0.0
      %492 = vmatprep.subr.mxu0 0.0
      %493 = vmatpush1.msra.mxu0 0.0
      %494 = vmatprep.subr.mxu0 0.0
      %495 = vmatpush1.msra.mxu0 0.0
      %496 = vmatprep.subr.mxu0 0.0
      %497 = vmatpush1.msra.mxu0 0.0
      %498 = vmatprep.subr.mxu0 0.0
      %499 = vmatpush1.msra.mxu0 0.0
      %500 = vmatprep.subr.mxu0 0.0
      %501 = vmatpush1.msra.mxu0 0.0
      %502 = vmatprep.subr.mxu0 0.0
      %503 = vmatpush1.msra.mxu0 0.0
      %504 = vmatprep.mubr.f32.mxu0 0.0
      %505 = vmatmul.mubr.f32.gmra.mrb[0].mxu0 %v389
      %v506 = vpop.f32.mrb[0].mxu0
      %v507 = vadd.f32 %v385, %v506
      %v508 = vpop.f32.mrb[0].mxu0
      %509 = vmatprep.mubr.f32.mxu0 0.0
      %510 = vmatmul.mubr.f32.gmra.mrb[0].mxu0 %v392
      %v511 = vpop.f32.mrb[0].mxu0
      %v512 = vadd.f32 %v385, %v511
      %v513 = vpop.f32.mrb[0].mxu0
      %514 = vmatprep.mubr.f32.mxu0 0.0
      %515 = vmatmul.mubr.f32.gmra.mrb[0].mxu0 %v395
      %v516 = vpop.f32.mrb[0].mxu0
      %v517 = vadd.f32 %v385, %v516
      %v518 = vpop.f32.mrb[0].mxu0
      %519 = vmatprep.mubr.f32.mxu0 0.0
      %520 = vmatmul.mubr.f32.gmra.mrb[0].mxu0 %v398
      %v521 = vpop.f32.mrb[0].mxu0
      %v522 = vadd.f32 %v385, %v521
      %v523 = vpop.f32.mrb[0].mxu0
      %524 = vmatprep.mubr.f32.mxu0 0.0
      %525 = vmatmul.mubr.f32.gmra.mrb[0].mxu0 %v401
      %v526 = vpop.f32.mrb[0].mxu0
      %v527 = vadd.f32 %v385, %v526
      %v528 = vpop.f32.mrb[0].mxu0
      %529 = vmatprep.mubr.f32.mxu0 0.0
      %530 = vmatmul.mubr.f32.gmra.mrb[0].mxu0 %v404
      %v531 = vpop.f32.mrb[0].mxu0
      %v532 = vadd.f32 %v385, %v531
      %v533 = vpop.f32.mrb[0].mxu0
      %534 = vmatprep.mubr.f32.mxu0 0.0
      %535 = vmatmul.mubr.f32.gmra.mrb[0].mxu0 %v407
      %v536 = vpop.f32.mrb[0].mxu0
      %v537 = vadd.f32 %v385, %v536
      %v538 = vpop.f32.mrb[0].mxu0
      %539 = vmatprep.mubr.f32.mxu0 0.0
      %540 = vmatmul.mubr.f32.gmra.mrb[0].mxu0 %v410
      %v541 = vpop.f32.mrb[0].mxu0
      %v542 = vadd.f32 %v385, %v541
      %v543 = vpop.f32.mrb[0].mxu0
      %544 = vmatprep.mubr.f32.mxu0 0.0
      %545 = vmatmul.mubr.f32.gmra.mrb[0].mxu0 %v413
      %v546 = vpop.f32.mrb[0].mxu0
      %v547 = vadd.f32 %v385, %v546
      %v548 = vpop.f32.mrb[0].mxu0
      %549 = vmatprep.mubr.f32.mxu0 0.0
      %550 = vmatmul.mubr.f32.gmra.mrb[0].mxu0 %v416
      %v551 = vpop.f32.mrb[0].mxu0
      %v552 = vadd.f32 %v385, %v551
      %v553 = vpop.f32.mrb[0].mxu0
      %554 = vmatprep.mubr.f32.mxu0 0.0
      %555 = vmatmul.mubr.f32.gmra.mrb[0].mxu0 %v419
      %v556 = vpop.f32.mrb[0].mxu0
      %v557 = vadd.f32 %v385, %v556
      %v558 = vpop.f32.mrb[0].mxu0
      %559 = vmatprep.mubr.f32.mxu0 0.0
      %560 = vmatmul.mubr.f32.gmra.mrb[0].mxu0 %v422
      %v561 = vpop.f32.mrb[0].mxu0
      %v562 = vadd.f32 %v385, %v561
      %v563 = vpop.f32.mrb[0].mxu0
      %564 = vmatprep.mubr.f32.mxu0 0.0
      %565 = vmatmul.mubr.f32.gmra.mrb[0].mxu0 %v425
      %v566 = vpop.f32.mrb[0].mxu0
      %v567 = vadd.f32 %v385, %v566
      %v568 = vpop.f32.mrb[0].mxu0
      %569 = vmatprep.mubr.f32.mxu0 0.0
      %570 = vmatmul.mubr.f32.gmra.mrb[0].mxu0 %v428
      %v571 = vpop.f32.mrb[0].mxu0
      %v572 = vadd.f32 %v385, %v571
      %v573 = vpop.f32.mrb[0].mxu0
      %574 = vmatprep.mubr.f32.mxu0 0.0
      %575 = vmatmul.mubr.f32.gmra.mrb[0].mxu0 %v431
      %v576 = vpop.f32.mrb[0].mxu0
      %v577 = vadd.f32 %v385, %v576
      %v578 = vpop.f32.mrb[0].mxu0
      %579 = vmatprep.mubr.f32.mxu0 0.0
      %580 = vmatmul.mubr.f32.gmra.mrb[0].mxu0 %v434
      %v581 = vpop.f32.mrb[0].mxu0
      %v582 = vadd.f32 %v385, %v581
      %v583 = vpop.f32.mrb[0].mxu0
      %584 = vdwg.mxu0
      %v585 = vmax.f32 %v507, 0.0
      %v586 = vmax.f32 %v512, 0.0
      %v587 = vmax.f32 %v517, 0.0
      %v588 = vmax.f32 %v522, 0.0
      %v589 = vmax.f32 %v527, 0.0
      %v590 = vmax.f32 %v532, 0.0
      %v591 = vmax.f32 %v537, 0.0
      %v592 = vmax.f32 %v542, 0.0
      %v593 = vmax.f32 %v547, 0.0
      %v594 = vmax.f32 %v552, 0.0
      %v595 = vmax.f32 %v557, 0.0
      %v596 = vmax.f32 %v562, 0.0
      %v597 = vmax.f32 %v567, 0.0
      %v598 = vmax.f32 %v572, 0.0
      %v599 = vmax.f32 %v577, 0.0
      %v600 = vmax.f32 %v582, 0.0
      %v601 = vld [vmem:[%s3] sm:$0xff]
      %v602 = vld [vmem:[%s3 + $0x8] sm:$0xff]
      %v603 = vld [vmem:[%s4] sm:$0x1]
      %v605 = vlaneseq
      %v606 = vshrl.u32 %v605, 7
      %v607 = vsub.s32 0, %v606
      %v608 = vrot.slane %v603, %v607
      %vm610 = vcmask 130048
      %v612 = vsel %vm610, %v585, 0
      %v615 = vsel %vm610, %v586, 0
      %v618 = vsel %vm610, %v587, 0
      %v621 = vsel %vm610, %v588, 0
      %v624 = vsel %vm610, %v589, 0
      %v627 = vsel %vm610, %v590, 0
      %v630 = vsel %vm610, %v591, 0
      %v633 = vsel %vm610, %v592, 0
      %v636 = vsel %vm610, %v593, 0
      %v639 = vsel %vm610, %v594, 0
      %v642 = vsel %vm610, %v595, 0
      %v645 = vsel %vm610, %v596, 0
      %v648 = vsel %vm610, %v597, 0
      %v651 = vsel %vm610, %v598, 0
      %v654 = vsel %vm610, %v599, 0
      %v657 = vsel %vm610, %v600, 0
      %659 = vmatprep.subr.mxu0 0.0
      %660 = vmatpush1.msra.mxu0 %v601
      %661 = vmatprep.subr.mxu0 0.0
      %662 = vmatpush1.msra.mxu0 %v602
      %663 = vmatprep.subr.mxu0 0.0
      %664 = vmatpush1.msra.mxu0 0.0
      %665 = vmatprep.subr.mxu0 0.0
      %666 = vmatpush1.msra.mxu0 0.0
      %667 = vmatprep.subr.mxu0 0.0
      %668 = vmatpush1.msra.mxu0 0.0
      %669 = vmatprep.subr.mxu0 0.0
      %670 = vmatpush1.msra.mxu0 0.0
      %671 = vmatprep.subr.mxu0 0.0
      %672 = vmatpush1.msra.mxu0 0.0
      %673 = vmatprep.subr.mxu0 0.0
      %674 = vmatpush1.msra.mxu0 0.0
      %675 = vmatprep.subr.mxu0 0.0
      %676 = vmatpush1.msra.mxu0 0.0
      %677 = vmatprep.subr.mxu0 0.0
      %678 = vmatpush1.msra.mxu0 0.0
      %679 = vmatprep.subr.mxu0 0.0
      %680 = vmatpush1.msra.mxu0 0.0
      %681 = vmatprep.subr.mxu0 0.0
      %682 = vmatpush1.msra.mxu0 0.0
      %683 = vmatprep.subr.mxu0 0.0
      %684 = vmatpush1.msra.mxu0 0.0
      %685 = vmatprep.subr.mxu0 0.0
      %686 = vmatpush1.msra.mxu0 0.0
      %687 = vmatprep.subr.mxu0 0.0
      %688 = vmatpush1.msra.mxu0 0.0
      %689 = vmatprep.subr.mxu0 0.0
      %690 = vmatpush1.msra.mxu0 0.0
      %691 = vmatprep.subr.mxu0 0.0
      %692 = vmatpush1.msra.mxu0 0.0
      %693 = vmatprep.subr.mxu0 0.0
      %694 = vmatpush1.msra.mxu0 0.0
      %695 = vmatprep.subr.mxu0 0.0
      %696 = vmatpush1.msra.mxu0 0.0
      %697 = vmatprep.subr.mxu0 0.0
      %698 = vmatpush1.msra.mxu0 0.0
      %699 = vmatprep.subr.mxu0 0.0
      %700 = vmatpush1.msra.mxu0 0.0
      %701 = vmatprep.subr.mxu0 0.0
      %702 = vmatpush1.msra.mxu0 0.0
      %703 = vmatprep.subr.mxu0 0.0
      %704 = vmatpush1.msra.mxu0 0.0
      %705 = vmatprep.subr.mxu0 0.0
      %706 = vmatpush1.msra.mxu0 0.0
      %707 = vmatprep.subr.mxu0 0.0
      %708 = vmatpush1.msra.mxu0 0.0
      %709 = vmatprep.subr.mxu0 0.0
      %710 = vmatpush1.msra.mxu0 0.0
      %711 = vmatprep.subr.mxu0 0.0
      %712 = vmatpush1.msra.mxu0 0.0
      %713 = vmatprep.subr.mxu0 0.0
      %714 = vmatpush1.msra.mxu0 0.0
      %715 = vmatprep.subr.mxu0 0.0
      %716 = vmatpush1.msra.mxu0 0.0
      %717 = vmatprep.subr.mxu0 0.0
      %718 = vmatpush1.msra.mxu0 0.0
      %719 = vmatprep.subr.mxu0 0.0
      %720 = vmatpush1.msra.mxu0 0.0
      %721 = vmatprep.subr.mxu0 0.0
      %722 = vmatpush1.msra.mxu0 0.0
      %723 = vmatprep.mubr.f32.mxu0 0.0
      %724 = vmatmul.mubr.f32.gmra.mrb[0].mxu0 %v612
      %v725 = vpop.f32.mrb[0].mxu0
      %v726 = vadd.f32 %v608, %v725
      %v727 = vpop.f32.mrb[0].mxu0
      %728 = vmatprep.mubr.f32.mxu0 0.0
      %729 = vmatmul.mubr.f32.gmra.mrb[0].mxu0 %v615
      %v730 = vpop.f32.mrb[0].mxu0
      %v731 = vadd.f32 %v608, %v730
      %v732 = vpop.f32.mrb[0].mxu0
      %733 = vmatprep.mubr.f32.mxu0 0.0
      %734 = vmatmul.mubr.f32.gmra.mrb[0].mxu0 %v618
      %v735 = vpop.f32.mrb[0].mxu0
      %v736 = vadd.f32 %v608, %v735
      %v737 = vpop.f32.mrb[0].mxu0
      %738 = vmatprep.mubr.f32.mxu0 0.0
      %739 = vmatmul.mubr.f32.gmra.mrb[0].mxu0 %v621
      %v740 = vpop.f32.mrb[0].mxu0
      %v741 = vadd.f32 %v608, %v740
      %v742 = vpop.f32.mrb[0].mxu0
      %743 = vmatprep.mubr.f32.mxu0 0.0
      %744 = vmatmul.mubr.f32.gmra.mrb[0].mxu0 %v624
      %v745 = vpop.f32.mrb[0].mxu0
      %v746 = vadd.f32 %v608, %v745
      %v747 = vpop.f32.mrb[0].mxu0
      %748 = vmatprep.mubr.f32.mxu0 0.0
      %749 = vmatmul.mubr.f32.gmra.mrb[0].mxu0 %v627
      %v750 = vpop.f32.mrb[0].mxu0
      %v751 = vadd.f32 %v608, %v750
      %v752 = vpop.f32.mrb[0].mxu0
      %753 = vmatprep.mubr.f32.mxu0 0.0
      %754 = vmatmul.mubr.f32.gmra.mrb[0].mxu0 %v630
      %v755 = vpop.f32.mrb[0].mxu0
      %v756 = vadd.f32 %v608, %v755
      %v757 = vpop.f32.mrb[0].mxu0
      %758 = vmatprep.mubr.f32.mxu0 0.0
      %759 = vmatmul.mubr.f32.gmra.mrb[0].mxu0 %v633
      %v760 = vpop.f32.mrb[0].mxu0
      %v761 = vadd.f32 %v608, %v760
      %v762 = vpop.f32.mrb[0].mxu0
      %763 = vmatprep.mubr.f32.mxu0 0.0
      %764 = vmatmul.mubr.f32.gmra.mrb[0].mxu0 %v636
      %v765 = vpop.f32.mrb[0].mxu0
      %v766 = vadd.f32 %v608, %v765
      %v767 = vpop.f32.mrb[0].mxu0
      %768 = vmatprep.mubr.f32.mxu0 0.0
      %769 = vmatmul.mubr.f32.gmra.mrb[0].mxu0 %v639
      %v770 = vpop.f32.mrb[0].mxu0
      %v771 = vadd.f32 %v608, %v770
      %v772 = vpop.f32.mrb[0].mxu0
      %773 = vmatprep.mubr.f32.mxu0 0.0
      %774 = vmatmul.mubr.f32.gmra.mrb[0].mxu0 %v642
      %v775 = vpop.f32.mrb[0].mxu0
      %v776 = vadd.f32 %v608, %v775
      %v777 = vpop.f32.mrb[0].mxu0
      %778 = vmatprep.mubr.f32.mxu0 0.0
      %779 = vmatmul.mubr.f32.gmra.mrb[0].mxu0 %v645
      %v780 = vpop.f32.mrb[0].mxu0
      %v781 = vadd.f32 %v608, %v780
      %v782 = vpop.f32.mrb[0].mxu0
      %783 = vmatprep.mubr.f32.mxu0 0.0
      %784 = vmatmul.mubr.f32.gmra.mrb[0].mxu0 %v648
      %v785 = vpop.f32.mrb[0].mxu0
      %v786 = vadd.f32 %v608, %v785
      %v787 = vpop.f32.mrb[0].mxu0
      %788 = vmatprep.mubr.f32.mxu0 0.0
      %789 = vmatmul.mubr.f32.gmra.mrb[0].mxu0 %v651
      %v790 = vpop.f32.mrb[0].mxu0
      %v791 = vadd.f32 %v608, %v790
      %v792 = vpop.f32.mrb[0].mxu0
      %793 = vmatprep.mubr.f32.mxu0 0.0
      %794 = vmatmul.mubr.f32.gmra.mrb[0].mxu0 %v654
      %v795 = vpop.f32.mrb[0].mxu0
      %v796 = vadd.f32 %v608, %v795
      %v797 = vpop.f32.mrb[0].mxu0
      %798 = vmatprep.mubr.f32.mxu0 0.0
      %799 = vmatmul.mubr.f32.gmra.mrb[0].mxu0 %v657
      %v800 = vpop.f32.mrb[0].mxu0
      %v801 = vadd.f32 %v608, %v800
      %v802 = vpop.f32.mrb[0].mxu0
      %803 = vdwg.mxu0
      %v804 = vmax.f32 %v726, 0.0
      %v805 = vmax.f32 %v731, 0.0
      %v806 = vmax.f32 %v736, 0.0
      %v807 = vmax.f32 %v741, 0.0
      %v808 = vmax.f32 %v746, 0.0
      %v809 = vmax.f32 %v751, 0.0
      %v810 = vmax.f32 %v756, 0.0
      %v811 = vmax.f32 %v761, 0.0
      %v812 = vmax.f32 %v766, 0.0
      %v813 = vmax.f32 %v771, 0.0
      %v814 = vmax.f32 %v776, 0.0
      %v815 = vmax.f32 %v781, 0.0
      %v816 = vmax.f32 %v786, 0.0
      %v817 = vmax.f32 %v791, 0.0
      %v818 = vmax.f32 %v796, 0.0
      %v819 = vmax.f32 %v801, 0.0
      %vm820 = vcmask 64512
      %v821 = vsel %vm820, %v804, 0.0
      %v822 = vrot.slane %v821, 4
      %v823 = vadd.f32 %v821, %v822
      %v824 = vrot.slane %v823, 2
      %v825 = vadd.f32 %v823, %v824
      %v826 = vrot.slane %v825, 1
      %v827 = vadd.f32 %v825, %v826
      %v828 = vsel %vm820, %v805, 0.0
      %v829 = vrot.slane %v828, 4
      %v830 = vadd.f32 %v828, %v829
      %v831 = vrot.slane %v830, 2
      %v832 = vadd.f32 %v830, %v831
      %v833 = vrot.slane %v832, 1
      %v834 = vadd.f32 %v832, %v833
      %v835 = vsel %vm820, %v806, 0.0
      %v836 = vrot.slane %v835, 4
      %v837 = vadd.f32 %v835, %v836
      %v838 = vrot.slane %v837, 2
      %v839 = vadd.f32 %v837, %v838
      %v840 = vrot.slane %v839, 1
      %v841 = vadd.f32 %v839, %v840
      %v842 = vsel %vm820, %v807, 0.0
      %v843 = vrot.slane %v842, 4
      %v844 = vadd.f32 %v842, %v843
      %v845 = vrot.slane %v844, 2
      %v846 = vadd.f32 %v844, %v845
      %v847 = vrot.slane %v846, 1
      %v848 = vadd.f32 %v846, %v847
      %v849 = vsel %vm820, %v808, 0.0
      %v850 = vrot.slane %v849, 4
      %v851 = vadd.f32 %v849, %v850
      %v852 = vrot.slane %v851, 2
      %v853 = vadd.f32 %v851, %v852
      %v854 = vrot.slane %v853, 1
      %v855 = vadd.f32 %v853, %v854
      %v856 = vsel %vm820, %v809, 0.0
      %v857 = vrot.slane %v856, 4
      %v858 = vadd.f32 %v856, %v857
      %v859 = vrot.slane %v858, 2
      %v860 = vadd.f32 %v858, %v859
      %v861 = vrot.slane %v860, 1
      %v862 = vadd.f32 %v860, %v861
      %v863 = vsel %vm820, %v810, 0.0
      %v864 = vrot.slane %v863, 4
      %v865 = vadd.f32 %v863, %v864
      %v866 = vrot.slane %v865, 2
      %v867 = vadd.f32 %v865, %v866
      %v868 = vrot.slane %v867, 1
      %v869 = vadd.f32 %v867, %v868
      %v870 = vsel %vm820, %v811, 0.0
      %v871 = vrot.slane %v870, 4
      %v872 = vadd.f32 %v870, %v871
      %v873 = vrot.slane %v872, 2
      %v874 = vadd.f32 %v872, %v873
      %v875 = vrot.slane %v874, 1
      %v876 = vadd.f32 %v874, %v875
      %v877 = vsel %vm820, %v812, 0.0
      %v878 = vrot.slane %v877, 4
      %v879 = vadd.f32 %v877, %v878
      %v880 = vrot.slane %v879, 2
      %v881 = vadd.f32 %v879, %v880
      %v882 = vrot.slane %v881, 1
      %v883 = vadd.f32 %v881, %v882
      %v884 = vsel %vm820, %v813, 0.0
      %v885 = vrot.slane %v884, 4
      %v886 = vadd.f32 %v884, %v885
      %v887 = vrot.slane %v886, 2
      %v888 = vadd.f32 %v886, %v887
      %v889 = vrot.slane %v888, 1
      %v890 = vadd.f32 %v888, %v889
      %v891 = vsel %vm820, %v814, 0.0
      %v892 = vrot.slane %v891, 4
      %v893 = vadd.f32 %v891, %v892
      %v894 = vrot.slane %v893, 2
      %v895 = vadd.f32 %v893, %v894
      %v896 = vrot.slane %v895, 1
      %v897 = vadd.f32 %v895, %v896
      %v898 = vsel %vm820, %v815, 0.0
      %v899 = vrot.slane %v898, 4
      %v900 = vadd.f32 %v898, %v899
      %v901 = vrot.slane %v900, 2
      %v902 = vadd.f32 %v900, %v901
      %v903 = vrot.slane %v902, 1
      %v904 = vadd.f32 %v902, %v903
      %v905 = vsel %vm820, %v816, 0.0
      %v906 = vrot.slane %v905, 4
      %v907 = vadd.f32 %v905, %v906
      %v908 = vrot.slane %v907, 2
      %v909 = vadd.f32 %v907, %v908
      %v910 = vrot.slane %v909, 1
      %v911 = vadd.f32 %v909, %v910
      %v912 = vsel %vm820, %v817, 0.0
      %v913 = vrot.slane %v912, 4
      %v914 = vadd.f32 %v912, %v913
      %v915 = vrot.slane %v914, 2
      %v916 = vadd.f32 %v914, %v915
      %v917 = vrot.slane %v916, 1
      %v918 = vadd.f32 %v916, %v917
      %v919 = vsel %vm820, %v818, 0.0
      %v920 = vrot.slane %v919, 4
      %v921 = vadd.f32 %v919, %v920
      %v922 = vrot.slane %v921, 2
      %v923 = vadd.f32 %v921, %v922
      %v924 = vrot.slane %v923, 1
      %v925 = vadd.f32 %v923, %v924
      %v926 = vsel %vm820, %v819, 0.0
      %v927 = vrot.slane %v926, 4
      %v928 = vadd.f32 %v926, %v927
      %v929 = vrot.slane %v928, 2
      %v930 = vadd.f32 %v928, %v929
      %v931 = vrot.slane %v930, 1
      %v932 = vadd.f32 %v930, %v931
      %v933 = vrcp.pop 8.0
      %v934 = vmul.f32 %v827, %v933
      %v935 = vmul.f32 %v834, %v933
      %v936 = vmul.f32 %v841, %v933
      %v937 = vmul.f32 %v848, %v933
      %v938 = vmul.f32 %v855, %v933
      %v939 = vmul.f32 %v862, %v933
      %v940 = vmul.f32 %v869, %v933
      %v941 = vmul.f32 %v876, %v933
      %v942 = vmul.f32 %v883, %v933
      %v943 = vmul.f32 %v890, %v933
      %v944 = vmul.f32 %v897, %v933
      %v945 = vmul.f32 %v904, %v933
      %v946 = vmul.f32 %v911, %v933
      %v947 = vmul.f32 %v918, %v933
      %v948 = vmul.f32 %v925, %v933
      %v949 = vmul.f32 %v932, %v933
      %v950 = vld [vmem:[%s6] sm:$0xff]
      %vm967 = vcmask 1041409
      %v968 = vsel %vm967, %v935, %v934
      %vm969 = vcmask 1042434
      %v970 = vsel %vm969, %v936, %v968
      %vm971 = vcmask 1043459
      %v972 = vsel %vm971, %v937, %v970
      %vm973 = vcmask 1044484
      %v974 = vsel %vm973, %v938, %v972
      %vm975 = vcmask 1045509
      %v976 = vsel %vm975, %v939, %v974
      %vm977 = vcmask 1046534
      %v978 = vsel %vm977, %v940, %v976
      %vm979 = vcmask 1047559
      %v980 = vsel %vm979, %v941, %v978
      %v981 = vsel %vm967, %v943, %v942
      %v982 = vsel %vm969, %v944, %v981
      %v983 = vsel %vm971, %v945, %v982
      %v984 = vsel %vm973, %v946, %v983
      %v985 = vsel %vm975, %v947, %v984
      %v986 = vsel %vm977, %v948, %v985
      %v987 = vsel %vm979, %v949, %v986
      %v988 = vsel %vm820, %v980, 0
      %v990 = vsel %vm820, %v987, 0
      %992 = vmatprep.subr.mxu0 0.0
      %993 = vmatpush1.msra.mxu0 %v950
      %994 = vmatprep.subr.mxu0 0.0
      %995 = vmatpush1.msra.mxu0 0.0
      %996 = vmatprep.subr.mxu0 0.0
      %997 = vmatpush1.msra.mxu0 0.0
      %998 = vmatprep.subr.mxu0 0.0
      %999 = vmatpush1.msra.mxu0 0.0
      %1000 = vmatprep.subr.mxu0 0.0
      %1001 = vmatpush1.msra.mxu0 0.0
      %1002 = vmatprep.subr.mxu0 0.0
      %1003 = vmatpush1.msra.mxu0 0.0
      %1004 = vmatprep.subr.mxu0 0.0
      %1005 = vmatpush1.msra.mxu0 0.0
      %1006 = vmatprep.subr.mxu0 0.0
      %1007 = vmatpush1.msra.mxu0 0.0
      %1008 = vmatprep.subr.mxu0 0.0
      %1009 = vmatpush1.msra.mxu0 0.0
      %1010 = vmatprep.subr.mxu0 0.0
      %1011 = vmatpush1.msra.mxu0 0.0
      %1012 = vmatprep.subr.mxu0 0.0
      %1013 = vmatpush1.msra.mxu0 0.0
      %1014 = vmatprep.subr.mxu0 0.0
      %1015 = vmatpush1.msra.mxu0 0.0
      %1016 = vmatprep.subr.mxu0 0.0
      %1017 = vmatpush1.msra.mxu0 0.0
      %1018 = vmatprep.subr.mxu0 0.0
      %1019 = vmatpush1.msra.mxu0 0.0
      %1020 = vmatprep.subr.mxu0 0.0
      %1021 = vmatpush1.msra.mxu0 0.0
      %1022 = vmatprep.subr.mxu0 0.0
      %1023 = vmatpush1.msra.mxu0 0.0
      %1024 = vmatprep.subr.mxu0 0.0
      %1025 = vmatpush1.msra.mxu0 0.0
      %1026 = vmatprep.subr.mxu0 0.0
      %1027 = vmatpush1.msra.mxu0 0.0
      %1028 = vmatprep.subr.mxu0 0.0
      %1029 = vmatpush1.msra.mxu0 0.0
      %1030 = vmatprep.subr.mxu0 0.0
      %1031 = vmatpush1.msra.mxu0 0.0
      %1032 = vmatprep.subr.mxu0 0.0
      %1033 = vmatpush1.msra.mxu0 0.0
      %1034 = vmatprep.subr.mxu0 0.0
      %1035 = vmatpush1.msra.mxu0 0.0
      %1036 = vmatprep.subr.mxu0 0.0
      %1037 = vmatpush1.msra.mxu0 0.0
      %1038 = vmatprep.subr.mxu0 0.0
      %1039 = vmatpush1.msra.mxu0 0.0
      %1040 = vmatprep.subr.mxu0 0.0
      %1041 = vmatpush1.msra.mxu0 0.0
      %1042 = vmatprep.subr.mxu0 0.0
      %1043 = vmatpush1.msra.mxu0 0.0
      %1044 = vmatprep.subr.mxu0 0.0
      %1045 = vmatpush1.msra.mxu0 0.0
      %1046 = vmatprep.subr.mxu0 0.0
      %1047 = vmatpush1.msra.mxu0 0.0
      %1048 = vmatprep.subr.mxu0 0.0
      %1049 = vmatpush1.msra.mxu0 0.0
      %1050 = vmatprep.subr.mxu0 0.0
      %1051 = vmatpush1.msra.mxu0 0.0
      %1052 = vmatprep.subr.mxu0 0.0
      %1053 = vmatpush1.msra.mxu0 0.0
      %1054 = vmatprep.subr.mxu0 0.0
      %1055 = vmatpush1.msra.mxu0 0.0
      %1056 = vmatprep.mubr.f32.mxu0 0.0
      %1057 = vmatmul.mubr.f32.gmra.mrb[0].mxu0 %v988
      %v1058 = vpop.f32.mrb[0].mxu0
      %v1059 = vadd.f32 0.0, %v1058
      %v1060 = vpop.f32.mrb[0].mxu0
      %1061 = vmatprep.mubr.f32.mxu0 0.0
      %1062 = vmatmul.mubr.f32.gmra.mrb[0].mxu0 %v990
      %v1063 = vpop.f32.mrb[0].mxu0
      %v1064 = vadd.f32 0.0, %v1063
      %v1065 = vpop.f32.mrb[0].mxu0
      %1066 = vdwg.mxu0
      %v1069 = vcombine.high %v1059, %v1059
      %v1071 = vunpack.c.l.s4 1966171168
      %v1072 = vunpack.c.0.s8 %v1071
      %v1073 = vlaneseq
      %v1074 = vshrl.u32 %v1073, 7
      %v1075 = vsub.s32 %v1072, %v1074
      %v1076 = vrot.slane %v1059, %v1075
      %v1078 = vunpack.c.l.s4 1966171168
      %v1079 = vunpack.c.0.s8 %v1078
      %v1080 = vlaneseq
      %v1081 = vshrl.u32 %v1080, 7
      %v1082 = vsub.s32 %v1079, %v1081
      %v1083 = vrot.slane %v1069, %v1082
      %v1084 = vcombine.high %v1076, %v1076
      %v1085 = vcombine.high %v1083, %v1083
      %v1087 = vunpack.c.l.s4 1966171168
      %v1088 = vunpack.c.0.s8 %v1087
      %v1089 = vlaneseq
      %v1090 = vshrl.u32 %v1089, 7
      %v1091 = vsub.s32 %v1088, %v1090
      %v1092 = vrot.slane %v1076, %v1091
      %v1094 = vunpack.c.l.s4 1966171168
      %v1095 = vunpack.c.0.s8 %v1094
      %v1096 = vlaneseq
      %v1097 = vshrl.u32 %v1096, 7
      %v1098 = vsub.s32 %v1095, %v1097
      %v1099 = vrot.slane %v1083, %v1098
      %v1101 = vunpack.c.l.s4 1966171168
      %v1102 = vunpack.c.0.s8 %v1101
      %v1103 = vlaneseq
      %v1104 = vshrl.u32 %v1103, 7
      %v1105 = vsub.s32 %v1102, %v1104
      %v1106 = vrot.slane %v1084, %v1105
      %v1108 = vunpack.c.l.s4 1966171168
      %v1109 = vunpack.c.0.s8 %v1108
      %v1110 = vlaneseq
      %v1111 = vshrl.u32 %v1110, 7
      %v1112 = vsub.s32 %v1109, %v1111
      %v1113 = vrot.slane %v1085, %v1112
      %v1114 = vcombine.high %v1092, %v1092
      %v1115 = vcombine.high %v1099, %v1099
      %v1116 = vcombine.high %v1106, %v1106
      %v1117 = vcombine.high %v1113, %v1113
      %v1118 = vcombine.high %v1064, %v1064
      %v1120 = vunpack.c.l.s4 1966171168
      %v1121 = vunpack.c.0.s8 %v1120
      %v1122 = vlaneseq
      %v1123 = vshrl.u32 %v1122, 7
      %v1124 = vsub.s32 %v1121, %v1123
      %v1125 = vrot.slane %v1064, %v1124
      %v1127 = vunpack.c.l.s4 1966171168
      %v1128 = vunpack.c.0.s8 %v1127
      %v1129 = vlaneseq
      %v1130 = vshrl.u32 %v1129, 7
      %v1131 = vsub.s32 %v1128, %v1130
      %v1132 = vrot.slane %v1118, %v1131
      %v1133 = vcombine.high %v1125, %v1125
      %v1134 = vcombine.high %v1132, %v1132
      %v1136 = vunpack.c.l.s4 1966171168
      %v1137 = vunpack.c.0.s8 %v1136
      %v1138 = vlaneseq
      %v1139 = vshrl.u32 %v1138, 7
      %v1140 = vsub.s32 %v1137, %v1139
      %v1141 = vrot.slane %v1125, %v1140
      %v1143 = vunpack.c.l.s4 1966171168
      %v1144 = vunpack.c.0.s8 %v1143
      %v1145 = vlaneseq
      %v1146 = vshrl.u32 %v1145, 7
      %v1147 = vsub.s32 %v1144, %v1146
      %v1148 = vrot.slane %v1132, %v1147
      %v1150 = vunpack.c.l.s4 1966171168
      %v1151 = vunpack.c.0.s8 %v1150
      %v1152 = vlaneseq
      %v1153 = vshrl.u32 %v1152, 7
      %v1154 = vsub.s32 %v1151, %v1153
      %v1155 = vrot.slane %v1133, %v1154
      %v1157 = vunpack.c.l.s4 1966171168
      %v1158 = vunpack.c.0.s8 %v1157
      %v1159 = vlaneseq
      %v1160 = vshrl.u32 %v1159, 7
      %v1161 = vsub.s32 %v1158, %v1160
      %v1162 = vrot.slane %v1134, %v1161
      %v1163 = vcombine.high %v1141, %v1141
      %v1164 = vcombine.high %v1148, %v1148
      %v1165 = vcombine.high %v1155, %v1155
      %v1166 = vcombine.high %v1162, %v1162
      %v1167 = vlaneseq
      %v1168 = vshrl.u32 %v1167, 7
      %v1169 = vsub.s32 0, %v1168
      %v1170 = vrot.slane %v1092, %v1169
      %v1171 = vlaneseq
      %v1172 = vshrl.u32 %v1171, 7
      %v1173 = vsub.s32 0, %v1172
      %v1174 = vrot.slane %v1106, %v1173
      %v1175 = vlaneseq
      %v1176 = vshrl.u32 %v1175, 7
      %v1177 = vsub.s32 0, %v1176
      %v1178 = vrot.slane %v1114, %v1177
      %v1179 = vlaneseq
      %v1180 = vshrl.u32 %v1179, 7
      %v1181 = vsub.s32 0, %v1180
      %v1182 = vrot.slane %v1116, %v1181
      %v1183 = vlaneseq
      %v1184 = vshrl.u32 %v1183, 7
      %v1185 = vsub.s32 0, %v1184
      %v1186 = vrot.slane %v1099, %v1185
      %v1187 = vlaneseq
      %v1188 = vshrl.u32 %v1187, 7
      %v1189 = vsub.s32 0, %v1188
      %v1190 = vrot.slane %v1113, %v1189
      %v1191 = vlaneseq
      %v1192 = vshrl.u32 %v1191, 7
      %v1193 = vsub.s32 0, %v1192
      %v1194 = vrot.slane %v1115, %v1193
      %v1195 = vlaneseq
      %v1196 = vshrl.u32 %v1195, 7
      %v1197 = vsub.s32 0, %v1196
      %v1198 = vrot.slane %v1117, %v1197
      %v1199 = vlaneseq
      %v1200 = vshrl.u32 %v1199, 7
      %v1201 = vsub.s32 0, %v1200
      %v1202 = vrot.slane %v1141, %v1201
      %v1203 = vlaneseq
      %v1204 = vshrl.u32 %v1203, 7
      %v1205 = vsub.s32 0, %v1204
      %v1206 = vrot.slane %v1155, %v1205
      %v1207 = vlaneseq
      %v1208 = vshrl.u32 %v1207, 7
      %v1209 = vsub.s32 0, %v1208
      %v1210 = vrot.slane %v1163, %v1209
      %v1211 = vlaneseq
      %v1212 = vshrl.u32 %v1211, 7
      %v1213 = vsub.s32 0, %v1212
      %v1214 = vrot.slane %v1165, %v1213
      %v1215 = vlaneseq
      %v1216 = vshrl.u32 %v1215, 7
      %v1217 = vsub.s32 0, %v1216
      %v1218 = vrot.slane %v1148, %v1217
      %v1219 = vlaneseq
      %v1220 = vshrl.u32 %v1219, 7
      %v1221 = vsub.s32 0, %v1220
      %v1222 = vrot.slane %v1162, %v1221
      %v1223 = vlaneseq
      %v1224 = vshrl.u32 %v1223, 7
      %v1225 = vsub.s32 0, %v1224
      %v1226 = vrot.slane %v1164, %v1225
      %v1227 = vlaneseq
      %v1228 = vshrl.u32 %v1227, 7
      %v1229 = vsub.s32 0, %v1228
      %v1230 = vrot.slane %v1166, %v1229
      %v1247 = vld [vmem:[%s5] sm:$0x3]
      %v1249 = vsel %vm436, %v1247, 0
      %1251 = vmatprep.subr.mxu0 0.0
      %1252 = vmatpush1.msra.mxu0 %v1249
      %1253 = vmatprep.subr.mxu0 0.0
      %1254 = vmatpush1.msra.mxu0 0.0
      %1255 = vmatprep.subr.mxu0 0.0
      %1256 = vmatpush1.msra.mxu0 0.0
      %1257 = vmatprep.subr.mxu0 0.0
      %1258 = vmatpush1.msra.mxu0 0.0
      %1259 = vmatprep.subr.mxu0 0.0
      %1260 = vmatpush1.msra.mxu0 0.0
      %1261 = vmatprep.subr.mxu0 0.0
      %1262 = vmatpush1.msra.mxu0 0.0
      %1263 = vmatprep.subr.mxu0 0.0
      %1264 = vmatpush1.msra.mxu0 0.0
      %1265 = vmatprep.subr.mxu0 0.0
      %1266 = vmatpush1.msra.mxu0 0.0
      %1267 = vmatprep.subr.mxu0 0.0
      %1268 = vmatpush1.msra.mxu0 0.0
      %1269 = vmatprep.subr.mxu0 0.0
      %1270 = vmatpush1.msra.mxu0 0.0
      %1271 = vmatprep.subr.mxu0 0.0
      %1272 = vmatpush1.msra.mxu0 0.0
      %1273 = vmatprep.subr.mxu0 0.0
      %1274 = vmatpush1.msra.mxu0 0.0
      %1275 = vmatprep.subr.mxu0 0.0
      %1276 = vmatpush1.msra.mxu0 0.0
      %1277 = vmatprep.subr.mxu0 0.0
      %1278 = vmatpush1.msra.mxu0 0.0
      %1279 = vmatprep.subr.mxu0 0.0
      %1280 = vmatpush1.msra.mxu0 0.0
      %1281 = vmatprep.subr.mxu0 0.0
      %1282 = vmatpush1.msra.mxu0 0.0
      %1283 = vmatprep.subr.mxu0 0.0
      %1284 = vmatpush1.msra.mxu0 0.0
      %1285 = vmatprep.subr.mxu0 0.0
      %1286 = vmatpush1.msra.mxu0 0.0
      %1287 = vmatprep.subr.mxu0 0.0
      %1288 = vmatpush1.msra.mxu0 0.0
      %1289 = vmatprep.subr.mxu0 0.0
      %1290 = vmatpush1.msra.mxu0 0.0
      %1291 = vmatprep.subr.mxu0 0.0
      %1292 = vmatpush1.msra.mxu0 0.0
      %1293 = vmatprep.subr.mxu0 0.0
      %1294 = vmatpush1.msra.mxu0 0.0
      %1295 = vmatprep.subr.mxu0 0.0
      %1296 = vmatpush1.msra.mxu0 0.0
      %1297 = vmatprep.subr.mxu0 0.0
      %1298 = vmatpush1.msra.mxu0 0.0
      %1299 = vmatprep.subr.mxu0 0.0
      %1300 = vmatpush1.msra.mxu0 0.0
      %1301 = vmatprep.subr.mxu0 0.0
      %1302 = vmatpush1.msra.mxu0 0.0
      %1303 = vmatprep.subr.mxu0 0.0
      %1304 = vmatpush1.msra.mxu0 0.0
      %1305 = vmatprep.subr.mxu0 0.0
      %1306 = vmatpush1.msra.mxu0 0.0
      %1307 = vmatprep.subr.mxu0 0.0
      %1308 = vmatpush1.msra.mxu0 0.0
      %1309 = vmatprep.subr.mxu0 0.0
      %1310 = vmatpush1.msra.mxu0 0.0
      %1311 = vmatprep.subr.mxu0 0.0
      %1312 = vmatpush1.msra.mxu0 0.0
      %1313 = vmatprep.subr.mxu0 0.0
      %1314 = vmatpush1.msra.mxu0 0.0
      %1315 = vmatprep.mubr.f32.mxu0 0.0
      %1316 = vmatmul.mubr.f32.gmra.mrb[0].mxu0 %v389
      %v1317 = vpop.f32.mrb[0].mxu0
      %v1318 = vadd.f32 %v1170, %v1317
      %v1319 = vpop.f32.mrb[0].mxu0
      %1320 = vmatprep.mubr.f32.mxu0 0.0
      %1321 = vmatmul.mubr.f32.gmra.mrb[0].mxu0 %v392
      %v1322 = vpop.f32.mrb[0].mxu0
      %v1323 = vadd.f32 %v1174, %v1322
      %v1324 = vpop.f32.mrb[0].mxu0
      %1325 = vmatprep.mubr.f32.mxu0 0.0
      %1326 = vmatmul.mubr.f32.gmra.mrb[0].mxu0 %v395
      %v1327 = vpop.f32.mrb[0].mxu0
      %v1328 = vadd.f32 %v1178, %v1327
      %v1329 = vpop.f32.mrb[0].mxu0
      %1330 = vmatprep.mubr.f32.mxu0 0.0
      %1331 = vmatmul.mubr.f32.gmra.mrb[0].mxu0 %v398
      %v1332 = vpop.f32.mrb[0].mxu0
      %v1333 = vadd.f32 %v1182, %v1332
      %v1334 = vpop.f32.mrb[0].mxu0
      %1335 = vmatprep.mubr.f32.mxu0 0.0
      %1336 = vmatmul.mubr.f32.gmra.mrb[0].mxu0 %v401
      %v1337 = vpop.f32.mrb[0].mxu0
      %v1338 = vadd.f32 %v1186, %v1337
      %v1339 = vpop.f32.mrb[0].mxu0
      %1340 = vmatprep.mubr.f32.mxu0 0.0
      %1341 = vmatmul.mubr.f32.gmra.mrb[0].mxu0 %v404
      %v1342 = vpop.f32.mrb[0].mxu0
      %v1343 = vadd.f32 %v1190, %v1342
      %v1344 = vpop.f32.mrb[0].mxu0
      %1345 = vmatprep.mubr.f32.mxu0 0.0
      %1346 = vmatmul.mubr.f32.gmra.mrb[0].mxu0 %v407
      %v1347 = vpop.f32.mrb[0].mxu0
      %v1348 = vadd.f32 %v1194, %v1347
      %v1349 = vpop.f32.mrb[0].mxu0
      %1350 = vmatprep.mubr.f32.mxu0 0.0
      %1351 = vmatmul.mubr.f32.gmra.mrb[0].mxu0 %v410
      %v1352 = vpop.f32.mrb[0].mxu0
      %v1353 = vadd.f32 %v1198, %v1352
      %v1354 = vpop.f32.mrb[0].mxu0
      %1355 = vmatprep.mubr.f32.mxu0 0.0
      %1356 = vmatmul.mubr.f32.gmra.mrb[0].mxu0 %v413
      %v1357 = vpop.f32.mrb[0].mxu0
      %v1358 = vadd.f32 %v1202, %v1357
      %v1359 = vpop.f32.mrb[0].mxu0
      %1360 = vmatprep.mubr.f32.mxu0 0.0
      %1361 = vmatmul.mubr.f32.gmra.mrb[0].mxu0 %v416
      %v1362 = vpop.f32.mrb[0].mxu0
      %v1363 = vadd.f32 %v1206, %v1362
      %v1364 = vpop.f32.mrb[0].mxu0
      %1365 = vmatprep.mubr.f32.mxu0 0.0
      %1366 = vmatmul.mubr.f32.gmra.mrb[0].mxu0 %v419
      %v1367 = vpop.f32.mrb[0].mxu0
      %v1368 = vadd.f32 %v1210, %v1367
      %v1369 = vpop.f32.mrb[0].mxu0
      %1370 = vmatprep.mubr.f32.mxu0 0.0
      %1371 = vmatmul.mubr.f32.gmra.mrb[0].mxu0 %v422
      %v1372 = vpop.f32.mrb[0].mxu0
      %v1373 = vadd.f32 %v1214, %v1372
      %v1374 = vpop.f32.mrb[0].mxu0
      %1375 = vmatprep.mubr.f32.mxu0 0.0
      %1376 = vmatmul.mubr.f32.gmra.mrb[0].mxu0 %v425
      %v1377 = vpop.f32.mrb[0].mxu0
      %v1378 = vadd.f32 %v1218, %v1377
      %v1379 = vpop.f32.mrb[0].mxu0
      %1380 = vmatprep.mubr.f32.mxu0 0.0
      %1381 = vmatmul.mubr.f32.gmra.mrb[0].mxu0 %v428
      %v1382 = vpop.f32.mrb[0].mxu0
      %v1383 = vadd.f32 %v1222, %v1382
      %v1384 = vpop.f32.mrb[0].mxu0
      %1385 = vmatprep.mubr.f32.mxu0 0.0
      %1386 = vmatmul.mubr.f32.gmra.mrb[0].mxu0 %v431
      %v1387 = vpop.f32.mrb[0].mxu0
      %v1388 = vadd.f32 %v1226, %v1387
      %v1389 = vpop.f32.mrb[0].mxu0
      %1390 = vmatprep.mubr.f32.mxu0 0.0
      %1391 = vmatmul.mubr.f32.gmra.mrb[0].mxu0 %v434
      %v1392 = vpop.f32.mrb[0].mxu0
      %v1393 = vadd.f32 %v1230, %v1392
      %v1394 = vpop.f32.mrb[0].mxu0
      %1395 = vdwg.mxu0
      %v1396 = vld [vmem:[%s7] sm:$0x1]
      %v1398 = vlaneseq
      %v1399 = vshrl.u32 %v1398, 7
      %v1400 = vsub.s32 0, %v1399
      %v1401 = vrot.slane %v1396, %v1400
      %v1403 = vadd.f32 %v1318, %v1401
      %v1404 = vadd.f32 %v1323, %v1401
      %v1405 = vadd.f32 %v1328, %v1401
      %v1406 = vadd.f32 %v1333, %v1401
      %v1407 = vadd.f32 %v1338, %v1401
      %v1408 = vadd.f32 %v1343, %v1401
      %v1409 = vadd.f32 %v1348, %v1401
      %v1410 = vadd.f32 %v1353, %v1401
      %v1411 = vadd.f32 %v1358, %v1401
      %v1412 = vadd.f32 %v1363, %v1401
      %v1413 = vadd.f32 %v1368, %v1401
      %v1414 = vadd.f32 %v1373, %v1401
      %v1415 = vadd.f32 %v1378, %v1401
      %v1416 = vadd.f32 %v1383, %v1401
      %v1417 = vadd.f32 %v1388, %v1401
      %v1418 = vadd.f32 %v1393, %v1401
      %v1419 = vmax.f32 %v1403, 0.0
      %v1420 = vmax.f32 %v1404, 0.0
      %v1421 = vmax.f32 %v1405, 0.0
      %v1422 = vmax.f32 %v1406, 0.0
      %v1423 = vmax.f32 %v1407, 0.0
      %v1424 = vmax.f32 %v1408, 0.0
      %v1425 = vmax.f32 %v1409, 0.0
      %v1426 = vmax.f32 %v1410, 0.0
      %v1427 = vmax.f32 %v1411, 0.0
      %v1428 = vmax.f32 %v1412, 0.0
      %v1429 = vmax.f32 %v1413, 0.0
      %v1430 = vmax.f32 %v1414, 0.0
      %v1431 = vmax.f32 %v1415, 0.0
      %v1432 = vmax.f32 %v1416, 0.0
      %v1433 = vmax.f32 %v1417, 0.0
      %v1434 = vmax.f32 %v1418, 0.0
      %v1435 = vld [vmem:[%s8] sm:$0xff]
      %v1436 = vld [vmem:[%s8 + $0x8] sm:$0xff]
      %v1437 = vld [vmem:[%s9] sm:$0x1]
      %v1439 = vlaneseq
      %v1440 = vshrl.u32 %v1439, 7
      %v1441 = vsub.s32 0, %v1440
      %v1442 = vrot.slane %v1437, %v1441
      %v1445 = vsel %vm610, %v1419, 0
      %v1448 = vsel %vm610, %v1420, 0
      %v1451 = vsel %vm610, %v1421, 0
      %v1454 = vsel %vm610, %v1422, 0
      %v1457 = vsel %vm610, %v1423, 0
      %v1460 = vsel %vm610, %v1424, 0
      %v1463 = vsel %vm610, %v1425, 0
      %v1466 = vsel %vm610, %v1426, 0
      %v1469 = vsel %vm610, %v1427, 0
      %v1472 = vsel %vm610, %v1428, 0
      %v1475 = vsel %vm610, %v1429, 0
      %v1478 = vsel %vm610, %v1430, 0
      %v1481 = vsel %vm610, %v1431, 0
      %v1484 = vsel %vm610, %v1432, 0
      %v1487 = vsel %vm610, %v1433, 0
      %v1490 = vsel %vm610, %v1434, 0
      %1492 = vmatprep.subr.mxu0 0.0
      %1493 = vmatpush1.msra.mxu0 %v1435
      %1494 = vmatprep.subr.mxu0 0.0
      %1495 = vmatpush1.msra.mxu0 %v1436
      %1496 = vmatprep.subr.mxu0 0.0
      %1497 = vmatpush1.msra.mxu0 0.0
      %1498 = vmatprep.subr.mxu0 0.0
      %1499 = vmatpush1.msra.mxu0 0.0
      %1500 = vmatprep.subr.mxu0 0.0
      %1501 = vmatpush1.msra.mxu0 0.0
      %1502 = vmatprep.subr.mxu0 0.0
      %1503 = vmatpush1.msra.mxu0 0.0
      %1504 = vmatprep.subr.mxu0 0.0
      %1505 = vmatpush1.msra.mxu0 0.0
      %1506 = vmatprep.subr.mxu0 0.0
      %1507 = vmatpush1.msra.mxu0 0.0
      %1508 = vmatprep.subr.mxu0 0.0
      %1509 = vmatpush1.msra.mxu0 0.0
      %1510 = vmatprep.subr.mxu0 0.0
      %1511 = vmatpush1.msra.mxu0 0.0
      %1512 = vmatprep.subr.mxu0 0.0
      %1513 = vmatpush1.msra.mxu0 0.0
      %1514 = vmatprep.subr.mxu0 0.0
      %1515 = vmatpush1.msra.mxu0 0.0
      %1516 = vmatprep.subr.mxu0 0.0
      %1517 = vmatpush1.msra.mxu0 0.0
      %1518 = vmatprep.subr.mxu0 0.0
      %1519 = vmatpush1.msra.mxu0 0.0
      %1520 = vmatprep.subr.mxu0 0.0
      %1521 = vmatpush1.msra.mxu0 0.0
      %1522 = vmatprep.subr.mxu0 0.0
      %1523 = vmatpush1.msra.mxu0 0.0
      %1524 = vmatprep.subr.mxu0 0.0
      %1525 = vmatpush1.msra.mxu0 0.0
      %1526 = vmatprep.subr.mxu0 0.0
      %1527 = vmatpush1.msra.mxu0 0.0
      %1528 = vmatprep.subr.mxu0 0.0
      %1529 = vmatpush1.msra.mxu0 0.0
      %1530 = vmatprep.subr.mxu0 0.0
      %1531 = vmatpush1.msra.mxu0 0.0
      %1532 = vmatprep.subr.mxu0 0.0
      %1533 = vmatpush1.msra.mxu0 0.0
      %1534 = vmatprep.subr.mxu0 0.0
      %1535 = vmatpush1.msra.mxu0 0.0
      %1536 = vmatprep.subr.mxu0 0.0
      %1537 = vmatpush1.msra.mxu0 0.0
      %1538 = vmatprep.subr.mxu0 0.0
      %1539 = vmatpush1.msra.mxu0 0.0
      %1540 = vmatprep.subr.mxu0 0.0
      %1541 = vmatpush1.msra.mxu0 0.0
      %1542 = vmatprep.subr.mxu0 0.0
      %1543 = vmatpush1.msra.mxu0 0.0
      %1544 = vmatprep.subr.mxu0 0.0
      %1545 = vmatpush1.msra.mxu0 0.0
      %1546 = vmatprep.subr.mxu0 0.0
      %1547 = vmatpush1.msra.mxu0 0.0
      %1548 = vmatprep.subr.mxu0 0.0
      %1549 = vmatpush1.msra.mxu0 0.0
      %1550 = vmatprep.subr.mxu0 0.0
      %1551 = vmatpush1.msra.mxu0 0.0
      %1552 = vmatprep.subr.mxu0 0.0
      %1553 = vmatpush1.msra.mxu0 0.0
      %1554 = vmatprep.subr.mxu0 0.0
      %1555 = vmatpush1.msra.mxu0 0.0
      %1556 = vmatprep.mubr.f32.mxu0 0.0
      %1557 = vmatmul.mubr.f32.gmra.mrb[0].mxu0 %v1445
      %v1558 = vpop.f32.mrb[0].mxu0
      %v1559 = vadd.f32 %v1442, %v1558
      %v1560 = vpop.f32.mrb[0].mxu0
      %1561 = vmatprep.mubr.f32.mxu0 0.0
      %1562 = vmatmul.mubr.f32.gmra.mrb[0].mxu0 %v1448
      %v1563 = vpop.f32.mrb[0].mxu0
      %v1564 = vadd.f32 %v1442, %v1563
      %v1565 = vpop.f32.mrb[0].mxu0
      %1566 = vmatprep.mubr.f32.mxu0 0.0
      %1567 = vmatmul.mubr.f32.gmra.mrb[0].mxu0 %v1451
      %v1568 = vpop.f32.mrb[0].mxu0
      %v1569 = vadd.f32 %v1442, %v1568
      %v1570 = vpop.f32.mrb[0].mxu0
      %1571 = vmatprep.mubr.f32.mxu0 0.0
      %1572 = vmatmul.mubr.f32.gmra.mrb[0].mxu0 %v1454
      %v1573 = vpop.f32.mrb[0].mxu0
      %v1574 = vadd.f32 %v1442, %v1573
      %v1575 = vpop.f32.mrb[0].mxu0
      %1576 = vmatprep.mubr.f32.mxu0 0.0
      %1577 = vmatmul.mubr.f32.gmra.mrb[0].mxu0 %v1457
      %v1578 = vpop.f32.mrb[0].mxu0
      %v1579 = vadd.f32 %v1442, %v1578
      %v1580 = vpop.f32.mrb[0].mxu0
      %1581 = vmatprep.mubr.f32.mxu0 0.0
      %1582 = vmatmul.mubr.f32.gmra.mrb[0].mxu0 %v1460
      %v1583 = vpop.f32.mrb[0].mxu0
      %v1584 = vadd.f32 %v1442, %v1583
      %v1585 = vpop.f32.mrb[0].mxu0
      %1586 = vmatprep.mubr.f32.mxu0 0.0
      %1587 = vmatmul.mubr.f32.gmra.mrb[0].mxu0 %v1463
      %v1588 = vpop.f32.mrb[0].mxu0
      %v1589 = vadd.f32 %v1442, %v1588
      %v1590 = vpop.f32.mrb[0].mxu0
      %1591 = vmatprep.mubr.f32.mxu0 0.0
      %1592 = vmatmul.mubr.f32.gmra.mrb[0].mxu0 %v1466
      %v1593 = vpop.f32.mrb[0].mxu0
      %v1594 = vadd.f32 %v1442, %v1593
      %v1595 = vpop.f32.mrb[0].mxu0
      %1596 = vmatprep.mubr.f32.mxu0 0.0
      %1597 = vmatmul.mubr.f32.gmra.mrb[0].mxu0 %v1469
      %v1598 = vpop.f32.mrb[0].mxu0
      %v1599 = vadd.f32 %v1442, %v1598
      %v1600 = vpop.f32.mrb[0].mxu0
      %1601 = vmatprep.mubr.f32.mxu0 0.0
      %1602 = vmatmul.mubr.f32.gmra.mrb[0].mxu0 %v1472
      %v1603 = vpop.f32.mrb[0].mxu0
      %v1604 = vadd.f32 %v1442, %v1603
      %v1605 = vpop.f32.mrb[0].mxu0
      %1606 = vmatprep.mubr.f32.mxu0 0.0
      %1607 = vmatmul.mubr.f32.gmra.mrb[0].mxu0 %v1475
      %v1608 = vpop.f32.mrb[0].mxu0
      %v1609 = vadd.f32 %v1442, %v1608
      %v1610 = vpop.f32.mrb[0].mxu0
      %1611 = vmatprep.mubr.f32.mxu0 0.0
      %1612 = vmatmul.mubr.f32.gmra.mrb[0].mxu0 %v1478
      %v1613 = vpop.f32.mrb[0].mxu0
      %v1614 = vadd.f32 %v1442, %v1613
      %v1615 = vpop.f32.mrb[0].mxu0
      %1616 = vmatprep.mubr.f32.mxu0 0.0
      %1617 = vmatmul.mubr.f32.gmra.mrb[0].mxu0 %v1481
      %v1618 = vpop.f32.mrb[0].mxu0
      %v1619 = vadd.f32 %v1442, %v1618
      %v1620 = vpop.f32.mrb[0].mxu0
      %1621 = vmatprep.mubr.f32.mxu0 0.0
      %1622 = vmatmul.mubr.f32.gmra.mrb[0].mxu0 %v1484
      %v1623 = vpop.f32.mrb[0].mxu0
      %v1624 = vadd.f32 %v1442, %v1623
      %v1625 = vpop.f32.mrb[0].mxu0
      %1626 = vmatprep.mubr.f32.mxu0 0.0
      %1627 = vmatmul.mubr.f32.gmra.mrb[0].mxu0 %v1487
      %v1628 = vpop.f32.mrb[0].mxu0
      %v1629 = vadd.f32 %v1442, %v1628
      %v1630 = vpop.f32.mrb[0].mxu0
      %1631 = vmatprep.mubr.f32.mxu0 0.0
      %1632 = vmatmul.mubr.f32.gmra.mrb[0].mxu0 %v1490
      %v1633 = vpop.f32.mrb[0].mxu0
      %v1634 = vadd.f32 %v1442, %v1633
      %v1635 = vpop.f32.mrb[0].mxu0
      %1636 = vdwg.mxu0
      %1637 = vst.msk [vmem:[%s361] sm:$0xff] %vm820, %v1559
      %1638 = vst.msk [vmem:[%s361 + $0x8] sm:$0xff] %vm820, %v1564
      %1639 = vst.msk [vmem:[%s361 + $0x10] sm:$0xff] %vm820, %v1569
      %1640 = vst.msk [vmem:[%s361 + $0x18] sm:$0xff] %vm820, %v1574
      %1641 = vst.msk [vmem:[%s361 + $0x20] sm:$0xff] %vm820, %v1579
      %1642 = vst.msk [vmem:[%s361 + $0x28] sm:$0xff] %vm820, %v1584
      %1643 = vst.msk [vmem:[%s361 + $0x30] sm:$0xff] %vm820, %v1589
      %1644 = vst.msk [vmem:[%s361 + $0x38] sm:$0xff] %vm820, %v1594
      %1645 = vst.msk [vmem:[%s361 + $0x40] sm:$0xff] %vm820, %v1599
      %1646 = vst.msk [vmem:[%s361 + $0x48] sm:$0xff] %vm820, %v1604
      %1647 = vst.msk [vmem:[%s361 + $0x50] sm:$0xff] %vm820, %v1609
      %1648 = vst.msk [vmem:[%s361 + $0x58] sm:$0xff] %vm820, %v1614
      %1649 = vst.msk [vmem:[%s361 + $0x60] sm:$0xff] %vm820, %v1619
      %1650 = vst.msk [vmem:[%s361 + $0x68] sm:$0xff] %vm820, %v1624
      %1651 = vst.msk [vmem:[%s361 + $0x70] sm:$0xff] %vm820, %v1629
      %1652 = vst.msk [vmem:[%s361 + $0x78] sm:$0xff] %vm820, %v1634
      %s1653 = smul.u32 16, %s21
      %p1654 = scmp.lt.s32.totalorder %s1653, 31
      %s1655 = scalar_select %p1654, %s1653, 31
      %s1656 = smul.addr %s1655, 8
      %s1657 = scalar_lea.vmem %s10, %s1656
      // Predicated region
      $region61: #{tpu_custom_call.1} parent=59 // pred_check
        %p1658 = pneg %p254
      $region62: #{tpu_custom_call.1} parent=59 // pred_check_branch
        %1660 = sbr.rel (%p1658) target = $region64
      $region63: #{tpu_custom_call.1} parent=59 // pred_region
        %s1661 = smul.u32 16, %s21
      $region64: #{tpu_custom_call.1} parent=59 // pred_fallthru
        _
    $region60: #{tpu_custom_call.1} parent=5 // pred_fallthru
      _
    %p1662 = scmp.le.s32.totalorder 2, %s16
    // Predicated region
    $region65: #{tpu_custom_call.1} parent=5 // pred_check
      %p1663 = pneg %p1662
    $region66: #{tpu_custom_call.1} parent=5 // pred_check_branch
      %1665 = sbr.rel (%p1663) target = $region68
    $region67: #{tpu_custom_call.1} parent=5 // pred_region
      %s1666 = ssub.s32 %s16, 2
      // Predicated region
      $region69: #{tpu_custom_call.1} parent=67 // pred_check
        %p1667 = pneg %p260
      $region70: #{tpu_custom_call.1} parent=67 // pred_check_branch
        %1669 = sbr.rel (%p1667) target = $region72
      $region71: #{tpu_custom_call.1} parent=67 // pred_region
        %s1670 = smul.u32 16, %s22
        %p1671 = scmp.lt.s32.totalorder %s1670, 31
        %s1672 = scalar_select %p1671, %s1670, 31
        %s1673 = smul.addr %s1672, 8
        %s1674 = scalar_lea.vmem %s10, %s1673
      $region72: #{tpu_custom_call.1} parent=67 // pred_fallthru
        _
    $region68: #{tpu_custom_call.1} parent=5 // pred_fallthru
      _
  $region6: #{tpu_custom_call.1} parent=0 // loop_footer
    %s20 = sadd.s32 1, %s16
  $region7: #{tpu_custom_call.1} parent=0 // loop_footer_branch
    %15 = sbr.rel target = $region3
  $region8: #{tpu_custom_call.1} parent=0 // loop_exit
    _

</llo_original>
